<compile_context>
chip_gen: v5e
topology: v5e:2x2
jax: 0.10.0
libtpu: 0.0.40
codegen_flags: <defaults>
</compile_context>

<pallas_src>
import functools

import jax
import jax.numpy as jnp
from jax import lax
from jax.experimental import pallas as pl
from jax.experimental.pallas import tpu as pltpu

K, STRIDE, PAD, EPS = 4, 2, 1, 1e-5

# (kind, in_ch, out_ch, activation) — mirrors FullyConvNetwork.__init__
LAYERS = [
    ("conv",   3,  8, "relu"),
    ("conv",   8, 16, "relu"),
    ("conv",  16, 32, "relu"),
    ("deconv", 32, 16, "relu"),
    ("deconv", 16,  8, "relu"),
    ("deconv",  8,  3, "tanh"),
]


def _layer_static(idx):
    kind, cin, cout, act = LAYERS[idx]
    groups = 1 if kind == "conv" else 4                       # deconv: 4 sub-pixel phase rows/ch
    cpad = cout if kind == "conv" else ((cout + 7) // 8) * 8  # 8-aligned phase-pooling slices
    return kind, cin, cout, cpad, groups, act


# ----------------------------------------------------------------------------
# Pallas kernel: bf16 GEMM (MXU) -> training-mode BatchNorm (folded) -> activation
# ----------------------------------------------------------------------------
def _gemm_bn_act_kernel(w_ref, p_ref, g_ref, b_ref, o_ref, *, act, groups, cpad, inv_count):
    # w_ref : [R, Kd]   bf16   R = groups*cpad output rows (groups=4 phase rows for deconv)
    # p_ref : [Kd, M]   bf16   patch matrix, M = N*Ho*Wo pixels on the lane axis
    # g_ref : [cpad, 1] f32    BatchNorm gamma (per channel)
    # b_ref : [cpad, 1] f32    BatchNorm beta  (per channel)
    y = jnp.dot(w_ref[...], p_ref[...], preferred_element_type=jnp.float32)   # [R, M] f32

    # Training-mode BatchNorm2d: per-channel mean / biased variance (eps=1e-5) over every output
    # pixel.  For deconv the 4 sub-pixel phase rows of a channel are pooled with static
    # 8-aligned slice adds on the VPU (no [R,R] pooling matmul; identity pool removed for conv).
    # The conv/deconv bias only shifts the mean and cancels exactly, so it is never added.
    row_sum = jnp.sum(y, axis=1, keepdims=True)                               # [R, 1]
    if groups == 1:
        mean_c = row_sum * inv_count                                          # [cpad, 1]
        mean_rows = mean_c
    else:
        mean_c = (row_sum[0:cpad] + row_sum[cpad:2 * cpad]
                  + row_sum[2 * cpad:3 * cpad] + row_sum[3 * cpad:4 * cpad]) * inv_count
        mean_rows = jnp.concatenate([mean_c] * groups, axis=0)                # [R, 1]

    d = y - mean_rows
    row_ssq = jnp.sum(d * d, axis=1, keepdims=True)                           # [R, 1]
    if groups == 1:
        var_c = row_ssq * inv_count
    else:
        var_c = (row_ssq[0:cpad] + row_ssq[cpad:2 * cpad]
                 + row_ssq[2 * cpad:3 * cpad] + row_ssq[3 * cpad:4 * cpad]) * inv_count

    # Fold BN into one per-channel scale/shift -> a single FMA over the [R, M] tensor.
    scale_c = g_ref[...] * lax.rsqrt(var_c + EPS)
    shift_c = b_ref[...] - mean_c * scale_c
    if groups == 1:
        scale_rows, shift_rows = scale_c, shift_c
    else:
        scale_rows = jnp.concatenate([scale_c] * groups, axis=0)
        shift_rows = jnp.concatenate([shift_c] * groups, axis=0)

    z = y * scale_rows + shift_rows
    if act == "relu":
        z = jnp.maximum(z, 0.0)
    else:  # tanh
        z = jnp.tanh(z)
    o_ref[...] = z.astype(o_ref.dtype)


def fused_gemm_bn_act(w_mat, patches, gamma_col, beta_col, *, act, groups, cpad, count, out_dtype):
    R, M = w_mat.shape[0], patches.shape[1]
    vmem = pl.BlockSpec(memory_space=pltpu.MemorySpace.VMEM)
    return pl.pallas_call(
        functools.partial(_gemm_bn_act_kernel, act=act, groups=groups, cpad=cpad,
                          inv_count=1.0 / float(count)),
        out_shape=jax.ShapeDtypeStruct((R, M), out_dtype),
        in_specs=[vmem] * 4,
        out_specs=vmem,
    )(w_mat, patches, gamma_col, beta_col)


# ----------------------------------------------------------------------------
# One-time parameter preparation (hoisted out of the per-step forward)
# ----------------------------------------------------------------------------
def _conv_weight_matrix(w):
    """(Cout, Cin, 4, 4) -> [Cout, 16*Cin]; column order (i*4+j)*Cin + cin (matches patches)."""
    cout, cin = w.shape[0], w.shape[1]
    return w.transpose(0, 2, 3, 1).reshape(cout, K * K * cin)


def _deconv_weight_matrix(w, cpad):
    """(Cin, Cout, 4, 4) ConvTranspose weight -> [4*cpad, 9*Cin] sub-pixel conv weight.

    Output phase (pr, pc) of ConvTranspose2d(k=4, s=2, p=1) equals a stride-1 conv over the
    1-padded input with taps (u, v) in {pr, pr+1} x {pc, pc+1} using kernel indices
    i = 3 - 2u + pr, j = 3 - 2v + pc.  Rows are ordered (pr, pc, cout); rows cout..cpad-1 are 0.
    """
    cin, cout = w.shape[0], w.shape[1]
    wd = jnp.zeros((4 * cpad, 9 * cin), jnp.float32)
    for pr in range(2):
        for pc in range(2):
            po = pr * 2 + pc
            for u in range(pr, pr + 2):
                for v in range(pc, pc + 2):
                    i, j = 3 - 2 * u + pr, 3 - 2 * v + pc
                    blk = w[:, :, i, j].T                           # (Cout, Cin)
                    wd = wd.at[po * cpad:po * cpad + cout,
                               (u * 3 + v) * cin:(u * 3 + v + 1) * cin].set(blk)
    return wd


def prepare_params(params):
    """Per layer: (w_mat bf16, gamma_col f32 [cpad,1], beta_col f32 [cpad,1]).  Called once."""
    prepared = []
    for idx, (w, _b, gamma, beta) in enumerate(params):   # bias cancels under train-mode BN
        kind, _cin, cout, cpad, _groups, _act = _layer_static(idx)
        w_mat = _conv_weight_matrix(w) if kind == "conv" else _deconv_weight_matrix(w, cpad)
        g_col = jnp.pad(gamma, (0, cpad - cout), constant_values=1.0).reshape(cpad, 1)
        b_col = jnp.pad(beta, (0, cpad - cout)).reshape(cpad, 1)
        prepared.append((w_mat.astype(jnp.bfloat16),
                         g_col.astype(jnp.float32), b_col.astype(jnp.float32)))
    return prepared


# ----------------------------------------------------------------------------
# Plain-JAX layout glue (patch matrices built from bf16 data; lane-dense pixel axis)
# ----------------------------------------------------------------------------
def _conv_patches(a):
    """a: [Cin, N, H, W] bf16 -> P[16*Cin, N*(H/2)*(W/2)] bf16 for the k=4 s=2 p=1 conv."""
    C, N, H, W = a.shape
    Ho, Wo = H // 2, W // 2
    ap = jnp.pad(a, ((0, 0), (0, 0), (PAD, PAD), (PAD, PAD)))
    taps = [ap[:, :, i:i + 2 * Ho - 1:2, j:j + 2 * Wo - 1:2]
            for i in range(K) for j in range(K)]                 # each [C, N, Ho, Wo]
    p = jnp.stack(taps, axis=0).reshape(K * K * C, N * Ho * Wo)  # row = (i*4+j)*C + c
    return p, (N, Ho, Wo)


def _deconv_patches(a):
    """a: [Cin, N, H, W] bf16 -> 3x3 stride-1 neighbourhoods P[9*Cin, N*H*W] (sub-pixel deconv)."""
    C, N, H, W = a.shape
    ap = jnp.pad(a, ((0, 0), (0, 0), (1, 1), (1, 1)))
    taps = [ap[:, :, u:u + H, v:v + W] for u in range(3) for v in range(3)]
    p = jnp.stack(taps, axis=0).reshape(9 * C, N * H * W)        # row = (u*3+v)*C + c
    return p, (N, H, W)


@jax.jit
def fcn_forward(x_nchw, prepared):
    # NCHW -> channel-major [C, N, H, W]; bf16 activations between layers.
    a = jnp.transpose(x_nchw, (1, 0, 2, 3)).astype(jnp.bfloat16)
    n_layers = len(prepared)
    for idx, (w_mat, g_col, b_col) in enumerate(prepared):
        kind, _cin, cout, cpad, groups, act = _layer_static(idx)
        is_last = idx == n_layers - 1
        if kind == "conv":
            patches, (N, Ho, Wo) = _conv_patches(a)
        else:
            patches, (N, Ho, Wo) = _deconv_patches(a)   # per-phase size (pre pixel-shuffle)
        M = patches.shape[1]
        y = fused_gemm_bn_act(
            w_mat, patches, g_col, b_col, act=act, groups=groups, cpad=cpad,
            count=groups * M, out_dtype=jnp.float32 if is_last else jnp.bfloat16)
        if kind == "conv":
            a = y.reshape(cout, N, Ho, Wo)
        else:
            # depth-to-space (pixel shuffle): kernel rows are ordered (pr, pc, channel).
            # TODO(synk): fold this interleave into the next layer's patch gather / an in-kernel
            # phase-indexed store to save one activation-sized shuffle per deconv layer.
            y = y.reshape(2, 2, cpad, N, Ho, Wo)
            y = y.transpose(2, 3, 4, 0, 5, 1).reshape(cpad, N, 2 * Ho, 2 * Wo)
            a = y[:cout]
    return jnp.transpose(a, (1, 0, 2, 3))                        # back to NCHW (f32)


# ----------------------------------------------------------------------------
# Pure-JAX reference of the PyTorch module (training-mode BatchNorm) for verification
# ----------------------------------------------------------------------------
def _bn_train(y, gamma, beta):
    mean = jnp.mean(y, axis=(0, 2, 3), keepdims=True)
    var = jnp.mean(jnp.square(y - mean), axis=(0, 2, 3), keepdims=True)   # biased, like PyTorch
    return ((y - mean) * lax.rsqrt(var + EPS) * gamma.reshape(1, -1, 1, 1)
            + beta.reshape(1, -1, 1, 1))


@functools.partial(jax.jit, static_argnames=("bf16_faithful",))
def fcn_reference(x, params, *, bf16_faithful=False):
    """With bf16_faithful=True, weights and inter-layer activations are rounded to bf16 at the
    same points as the Pallas path, isolating indexing/semantics from bf16 quantization error."""
    def q(t):
        return t.astype(jnp.bfloat16).astype(jnp.float32) if bf16_faithful else t

    a = q(x)
    for idx, (w, b, gamma, beta) in enumerate(params):
        kind, _cin, _cout, _cpad, _groups, act = _layer_static(idx)
        w = q(w)
        if kind == "conv":
            y = lax.conv_general_dilated(
                a, w, (2, 2), ((1, 1), (1, 1)),
                dimension_numbers=("NCHW", "OIHW", "NCHW"), precision=lax.Precision.HIGHEST)
        else:  # ConvTranspose2d == conv of lhs-dilated input with flipped, io-swapped kernel
            wt = jnp.flip(w, (2, 3)).transpose(1, 0, 2, 3)
            y = lax.conv_general_dilated(
                a, wt, (1, 1), ((2, 2), (2, 2)), lhs_dilation=(2, 2),
                dimension_numbers=("NCHW", "OIHW", "NCHW"), precision=lax.Precision.HIGHEST)
        y = _bn_train(y + b.reshape(1, -1, 1, 1), gamma, beta)
        y = jnp.maximum(y, 0.0) if act == "relu" else jnp.tanh(y)
        a = y if idx == len(params) - 1 else q(y)
    return a


# ----------------------------------------------------------------------------
# Deterministic parameter init (PyTorch-style uniform(-1/sqrt(fan_in), ...))
# ----------------------------------------------------------------------------
def init_params(key):
    params = []
    for (kind, cin, cout, _act) in LAYERS:
        key, kw, kb = jax.random.split(key, 3)
        w_shape = (cout, cin, K, K) if kind == "conv" else (cin, cout, K, K)
        fan_in = cin * K * K
        bound = 1.0 / (fan_in ** 0.5)
        w = jax.random.uniform(kw, w_shape, jnp.float32, -bound, bound)
        b = jax.random.uniform(kb, (cout,), jnp.float32, -bound, bound)
        gamma = jnp.ones((cout,), jnp.float32)    # BatchNorm2d default init
        beta = jnp.zeros((cout,), jnp.float32)
        params.append((w, b, gamma, beta))
    return params


if __name__ == "__main__":
    key = jax.random.PRNGKey(0)
    key, kx = jax.random.split(key)
    # Small but lane-friendlier shapes (review item 7): H, W divisible by 8 (three stride-2
    # stages); batch 4 keeps the pixel axis M = N*Ho*Wo >= 64 in every layer.
    x = jax.random.normal(kx, (4, 3, 32, 32), jnp.float32)    # NCHW like PyTorch
    params = init_params(key)
    prepared = prepare_params(params)                         # one-time constant prep

    out = jax.block_until_ready(fcn_forward(x, prepared))

    assert out.shape == (4, 3, 32, 32), out.shape
    assert bool(jnp.all(jnp.isfinite(out)))
    assert bool(jnp.all(jnp.abs(out) <= 1.0 + 1e-5))          # final Tanh

    # Structural correctness vs a bf16-faithful reference (same rounding points as the kernel
    # path), plus a loose sanity bound vs the exact f32 reference of the PyTorch module.
    ref_q = jax.block_until_ready(fcn_reference(x, params, bf16_faithful=True))
    ref_f = jax.block_until_ready(fcn_reference(x, params, bf16_faithful=False))
    err_q = float(jnp.max(jnp.abs(out - ref_q)))
    err_f = float(jnp.max(jnp.abs(out - ref_f)))
    assert err_q < 0.1, f"mismatch vs bf16-faithful reference: {err_q}"
    assert err_f < 0.35, f"mismatch vs f32 reference: {err_f}"

    print("KERNEL_OK")
</pallas_src>

<mosaic_0001>
module attributes {stable_mosaic.version = 11 : i64} {
  func.func @_gemm_bn_act_kernel(%arg0: memref<8x48xbf16, #tpu.memory_space<vmem>>, %arg1: memref<48x1024xbf16, #tpu.memory_space<vmem>>, %arg2: memref<8x1xf32, #tpu.memory_space<vmem>>, %arg3: memref<8x1xf32, #tpu.memory_space<vmem>>, %arg4: memref<8x1024xbf16, #tpu.memory_space<vmem>>) attributes {dimension_semantics = [], scalar_prefetch = 0 : i64, scratch_operands = 0 : i64, tpu.core_type = #tpu.core_type<tc>} {
    %c0 = arith.constant 0 : index
    %c0_0 = arith.constant 0 : index
    %0 = vector.load %arg0[%c0, %c0_0] : memref<8x48xbf16, #tpu.memory_space<vmem>>, vector<8x48xbf16>
    %c0_1 = arith.constant 0 : index
    %c0_2 = arith.constant 0 : index
    %1 = vector.load %arg1[%c0_1, %c0_2] : memref<48x1024xbf16, #tpu.memory_space<vmem>>, vector<48x1024xbf16>
    %cst = arith.constant dense<0.000000e+00> : vector<8x1024xf32>
    %2 = tpu.matmul %0, %1, %cst {dimension_numbers = #tpu.dot_dimension_numbers<[1], [0], [0], [1], [0, 0, 1, 1], [], []>} : vector<8x48xbf16>, vector<48x1024xbf16>, vector<8x1024xf32> -> vector<8x1024xf32>
    %cst_3 = arith.constant dense<0.000000e+00> : vector<8xf32>
    %3 = vector.multi_reduction <add>, %2, %cst_3 [1] : vector<8x1024xf32> to vector<8xf32>
    %4 = vector.shape_cast %3 : vector<8xf32> to vector<8x1xf32>
    %cst_4 = arith.constant 9.765625E-4 : f32
    %5 = vector.broadcast %cst_4 : f32 to vector<8x1xf32>
    %6 = arith.mulf %4, %5 : vector<8x1xf32>
    %7 = vector.broadcast %6 : vector<8x1xf32> to vector<8x1024xf32>
    %8 = arith.subf %2, %7 : vector<8x1024xf32>
    %9 = arith.mulf %8, %8 : vector<8x1024xf32>
    %cst_5 = arith.constant dense<0.000000e+00> : vector<8xf32>
    %10 = vector.multi_reduction <add>, %9, %cst_5 [1] : vector<8x1024xf32> to vector<8xf32>
    %11 = vector.shape_cast %10 : vector<8xf32> to vector<8x1xf32>
    %cst_6 = arith.constant 9.765625E-4 : f32
    %12 = vector.broadcast %cst_6 : f32 to vector<8x1xf32>
    %13 = arith.mulf %11, %12 : vector<8x1xf32>
    %c0_7 = arith.constant 0 : index
    %c0_8 = arith.constant 0 : index
    %14 = vector.load %arg2[%c0_7, %c0_8] : memref<8x1xf32, #tpu.memory_space<vmem>>, vector<8x1xf32>
    %cst_9 = arith.constant 9.99999974E-6 : f32
    %15 = vector.broadcast %cst_9 : f32 to vector<8x1xf32>
    %16 = arith.addf %13, %15 : vector<8x1xf32>
    %17 = math.rsqrt %16 : vector<8x1xf32>
    %18 = arith.mulf %14, %17 : vector<8x1xf32>
    %c0_10 = arith.constant 0 : index
    %c0_11 = arith.constant 0 : index
    %19 = vector.load %arg3[%c0_10, %c0_11] : memref<8x1xf32, #tpu.memory_space<vmem>>, vector<8x1xf32>
    %20 = arith.mulf %6, %18 : vector<8x1xf32>
    %21 = arith.subf %19, %20 : vector<8x1xf32>
    %22 = vector.broadcast %18 : vector<8x1xf32> to vector<8x1024xf32>
    %23 = arith.mulf %2, %22 : vector<8x1024xf32>
    %24 = vector.broadcast %21 : vector<8x1xf32> to vector<8x1024xf32>
    %25 = arith.addf %23, %24 : vector<8x1024xf32>
    %cst_12 = arith.constant 0.000000e+00 : f32
    %26 = vector.broadcast %cst_12 : f32 to vector<8x1024xf32>
    %27 = arith.maximumf %25, %26 : vector<8x1024xf32>
    %28 = arith.truncf %27 : vector<8x1024xf32> to vector<8x1024xbf16>
    %c0_13 = arith.constant 0 : index
    %c0_14 = arith.constant 0 : index
    %29 = vector.load %arg4[%c0_13, %c0_14] : memref<8x1024xbf16, #tpu.memory_space<vmem>>, vector<8x1024xbf16>
    tpu.vector_store %arg4[%c0_13, %c0_14], %28 {strides = array<i32>} : memref<8x1024xbf16, #tpu.memory_space<vmem>>, vector<8x1024xbf16>,
    return
  }
}

module attributes {stable_mosaic.version = 11 : i64} {
  func.func @_gemm_bn_act_kernel(%arg0: memref<16x128xbf16, #tpu.memory_space<vmem>>, %arg1: memref<128x256xbf16, #tpu.memory_space<vmem>>, %arg2: memref<16x1xf32, #tpu.memory_space<vmem>>, %arg3: memref<16x1xf32, #tpu.memory_space<vmem>>, %arg4: memref<16x256xbf16, #tpu.memory_space<vmem>>) attributes {dimension_semantics = [], scalar_prefetch = 0 : i64, scratch_operands = 0 : i64, tpu.core_type = #tpu.core_type<tc>} {
    %c0 = arith.constant 0 : index
    %c0_0 = arith.constant 0 : index
    %0 = vector.load %arg0[%c0, %c0_0] : memref<16x128xbf16, #tpu.memory_space<vmem>>, vector<16x128xbf16>
    %c0_1 = arith.constant 0 : index
    %c0_2 = arith.constant 0 : index
    %1 = vector.load %arg1[%c0_1, %c0_2] : memref<128x256xbf16, #tpu.memory_space<vmem>>, vector<128x256xbf16>
    %cst = arith.constant dense<0.000000e+00> : vector<16x256xf32>
    %2 = tpu.matmul %0, %1, %cst {dimension_numbers = #tpu.dot_dimension_numbers<[1], [0], [0], [1], [0, 0, 1, 1], [], []>} : vector<16x128xbf16>, vector<128x256xbf16>, vector<16x256xf32> -> vector<16x256xf32>
    %cst_3 = arith.constant dense<0.000000e+00> : vector<16xf32>
    %3 = vector.multi_reduction <add>, %2, %cst_3 [1] : vector<16x256xf32> to vector<16xf32>
    %4 = vector.shape_cast %3 : vector<16xf32> to vector<16x1xf32>
    %cst_4 = arith.constant 3.906250e-03 : f32
    %5 = vector.broadcast %cst_4 : f32 to vector<16x1xf32>
    %6 = arith.mulf %4, %5 : vector<16x1xf32>
    %7 = vector.broadcast %6 : vector<16x1xf32> to vector<16x256xf32>
    %8 = arith.subf %2, %7 : vector<16x256xf32>
    %9 = arith.mulf %8, %8 : vector<16x256xf32>
    %cst_5 = arith.constant dense<0.000000e+00> : vector<16xf32>
    %10 = vector.multi_reduction <add>, %9, %cst_5 [1] : vector<16x256xf32> to vector<16xf32>
    %11 = vector.shape_cast %10 : vector<16xf32> to vector<16x1xf32>
    %cst_6 = arith.constant 3.906250e-03 : f32
    %12 = vector.broadcast %cst_6 : f32 to vector<16x1xf32>
    %13 = arith.mulf %11, %12 : vector<16x1xf32>
    %c0_7 = arith.constant 0 : index
    %c0_8 = arith.constant 0 : index
    %14 = vector.load %arg2[%c0_7, %c0_8] : memref<16x1xf32, #tpu.memory_space<vmem>>, vector<16x1xf32>
    %cst_9 = arith.constant 9.99999974E-6 : f32
    %15 = vector.broadcast %cst_9 : f32 to vector<16x1xf32>
    %16 = arith.addf %13, %15 : vector<16x1xf32>
    %17 = math.rsqrt %16 : vector<16x1xf32>
    %18 = arith.mulf %14, %17 : vector<16x1xf32>
    %c0_10 = arith.constant 0 : index
    %c0_11 = arith.constant 0 : index
    %19 = vector.load %arg3[%c0_10, %c0_11] : memref<16x1xf32, #tpu.memory_space<vmem>>, vector<16x1xf32>
    %20 = arith.mulf %6, %18 : vector<16x1xf32>
    %21 = arith.subf %19, %20 : vector<16x1xf32>
    %22 = vector.broadcast %18 : vector<16x1xf32> to vector<16x256xf32>
    %23 = arith.mulf %2, %22 : vector<16x256xf32>
    %24 = vector.broadcast %21 : vector<16x1xf32> to vector<16x256xf32>
    %25 = arith.addf %23, %24 : vector<16x256xf32>
    %cst_12 = arith.constant 0.000000e+00 : f32
    %26 = vector.broadcast %cst_12 : f32 to vector<16x256xf32>
    %27 = arith.maximumf %25, %26 : vector<16x256xf32>
    %28 = arith.truncf %27 : vector<16x256xf32> to vector<16x256xbf16>
    %c0_13 = arith.constant 0 : index
    %c0_14 = arith.constant 0 : index
    %29 = vector.load %arg4[%c0_13, %c0_14] : memref<16x256xbf16, #tpu.memory_space<vmem>>, vector<16x256xbf16>
    tpu.vector_store %arg4[%c0_13, %c0_14], %28 {strides = array<i32>} : memref<16x256xbf16, #tpu.memory_space<vmem>>, vector<16x256xbf16>,
    return
  }
}

module attributes {stable_mosaic.version = 11 : i64} {
  func.func @_gemm_bn_act_kernel(%arg0: memref<32x256xbf16, #tpu.memory_space<vmem>>, %arg1: memref<256x64xbf16, #tpu.memory_space<vmem>>, %arg2: memref<32x1xf32, #tpu.memory_space<vmem>>, %arg3: memref<32x1xf32, #tpu.memory_space<vmem>>, %arg4: memref<32x64xbf16, #tpu.memory_space<vmem>>) attributes {dimension_semantics = [], scalar_prefetch = 0 : i64, scratch_operands = 0 : i64, tpu.core_type = #tpu.core_type<tc>} {
    %c0 = arith.constant 0 : index
    %c0_0 = arith.constant 0 : index
    %0 = vector.load %arg0[%c0, %c0_0] : memref<32x256xbf16, #tpu.memory_space<vmem>>, vector<32x256xbf16>
    %c0_1 = arith.constant 0 : index
    %c0_2 = arith.constant 0 : index
    %1 = vector.load %arg1[%c0_1, %c0_2] : memref<256x64xbf16, #tpu.memory_space<vmem>>, vector<256x64xbf16>
    %cst = arith.constant dense<0.000000e+00> : vector<32x64xf32>
    %2 = tpu.matmul %0, %1, %cst {dimension_numbers = #tpu.dot_dimension_numbers<[1], [0], [0], [1], [0, 0, 1, 1], [], []>} : vector<32x256xbf16>, vector<256x64xbf16>, vector<32x64xf32> -> vector<32x64xf32>
    %cst_3 = arith.constant dense<0.000000e+00> : vector<32xf32>
    %3 = vector.multi_reduction <add>, %2, %cst_3 [1] : vector<32x64xf32> to vector<32xf32>
    %4 = vector.shape_cast %3 : vector<32xf32> to vector<32x1xf32>
    %cst_4 = arith.constant 1.562500e-02 : f32
    %5 = vector.broadcast %cst_4 : f32 to vector<32x1xf32>
    %6 = arith.mulf %4, %5 : vector<32x1xf32>
    %7 = vector.broadcast %6 : vector<32x1xf32> to vector<32x64xf32>
    %8 = arith.subf %2, %7 : vector<32x64xf32>
    %9 = arith.mulf %8, %8 : vector<32x64xf32>
    %cst_5 = arith.constant dense<0.000000e+00> : vector<32xf32>
    %10 = vector.multi_reduction <add>, %9, %cst_5 [1] : vector<32x64xf32> to vector<32xf32>
    %11 = vector.shape_cast %10 : vector<32xf32> to vector<32x1xf32>
    %cst_6 = arith.constant 1.562500e-02 : f32
    %12 = vector.broadcast %cst_6 : f32 to vector<32x1xf32>
    %13 = arith.mulf %11, %12 : vector<32x1xf32>
    %c0_7 = arith.constant 0 : index
    %c0_8 = arith.constant 0 : index
    %14 = vector.load %arg2[%c0_7, %c0_8] : memref<32x1xf32, #tpu.memory_space<vmem>>, vector<32x1xf32>
    %cst_9 = arith.constant 9.99999974E-6 : f32
    %15 = vector.broadcast %cst_9 : f32 to vector<32x1xf32>
    %16 = arith.addf %13, %15 : vector<32x1xf32>
    %17 = math.rsqrt %16 : vector<32x1xf32>
    %18 = arith.mulf %14, %17 : vector<32x1xf32>
    %c0_10 = arith.constant 0 : index
    %c0_11 = arith.constant 0 : index
    %19 = vector.load %arg3[%c0_10, %c0_11] : memref<32x1xf32, #tpu.memory_space<vmem>>, vector<32x1xf32>
    %20 = arith.mulf %6, %18 : vector<32x1xf32>
    %21 = arith.subf %19, %20 : vector<32x1xf32>
    %22 = vector.broadcast %18 : vector<32x1xf32> to vector<32x64xf32>
    %23 = arith.mulf %2, %22 : vector<32x64xf32>
    %24 = vector.broadcast %21 : vector<32x1xf32> to vector<32x64xf32>
    %25 = arith.addf %23, %24 : vector<32x64xf32>
    %cst_12 = arith.constant 0.000000e+00 : f32
    %26 = vector.broadcast %cst_12 : f32 to vector<32x64xf32>
    %27 = arith.maximumf %25, %26 : vector<32x64xf32>
    %28 = arith.truncf %27 : vector<32x64xf32> to vector<32x64xbf16>
    %c0_13 = arith.constant 0 : index
    %c0_14 = arith.constant 0 : index
    %29 = vector.load %arg4[%c0_13, %c0_14] : memref<32x64xbf16, #tpu.memory_space<vmem>>, vector<32x64xbf16>
    tpu.vector_store %arg4[%c0_13, %c0_14], %28 {strides = array<i32>} : memref<32x64xbf16, #tpu.memory_space<vmem>>, vector<32x64xbf16>,
    return
  }
}

module attributes {stable_mosaic.version = 11 : i64} {
  func.func @_gemm_bn_act_kernel(%arg0: memref<64x288xbf16, #tpu.memory_space<vmem>>, %arg1: memref<288x64xbf16, #tpu.memory_space<vmem>>, %arg2: memref<16x1xf32, #tpu.memory_space<vmem>>, %arg3: memref<16x1xf32, #tpu.memory_space<vmem>>, %arg4: memref<64x64xbf16, #tpu.memory_space<vmem>>) attributes {dimension_semantics = [], scalar_prefetch = 0 : i64, scratch_operands = 0 : i64, tpu.core_type = #tpu.core_type<tc>} {
    %c0 = arith.constant 0 : index
    %c0_0 = arith.constant 0 : index
    %0 = vector.load %arg0[%c0, %c0_0] : memref<64x288xbf16, #tpu.memory_space<vmem>>, vector<64x288xbf16>
    %c0_1 = arith.constant 0 : index
    %c0_2 = arith.constant 0 : index
    %1 = vector.load %arg1[%c0_1, %c0_2] : memref<288x64xbf16, #tpu.memory_space<vmem>>, vector<288x64xbf16>
    %cst = arith.constant dense<0.000000e+00> : vector<64x64xf32>
    %2 = tpu.matmul %0, %1, %cst {dimension_numbers = #tpu.dot_dimension_numbers<[1], [0], [0], [1], [0, 0, 1, 1], [], []>} : vector<64x288xbf16>, vector<288x64xbf16>, vector<64x64xf32> -> vector<64x64xf32>
    %cst_3 = arith.constant dense<0.000000e+00> : vector<64xf32>
    %3 = vector.multi_reduction <add>, %2, %cst_3 [1] : vector<64x64xf32> to vector<64xf32>
    %4 = vector.shape_cast %3 : vector<64xf32> to vector<64x1xf32>
    %5 = vector.extract_strided_slice %4 {offsets = [0, 0], sizes = [16, 1], strides = [1, 1]} : vector<64x1xf32> to vector<16x1xf32>
    %6 = vector.extract_strided_slice %4 {offsets = [16, 0], sizes = [16, 1], strides = [1, 1]} : vector<64x1xf32> to vector<16x1xf32>
    %7 = arith.addf %5, %6 : vector<16x1xf32>
    %8 = vector.extract_strided_slice %4 {offsets = [32, 0], sizes = [16, 1], strides = [1, 1]} : vector<64x1xf32> to vector<16x1xf32>
    %9 = arith.addf %7, %8 : vector<16x1xf32>
    %10 = vector.extract_strided_slice %4 {offsets = [48, 0], sizes = [16, 1], strides = [1, 1]} : vector<64x1xf32> to vector<16x1xf32>
    %11 = arith.addf %9, %10 : vector<16x1xf32>
    %cst_4 = arith.constant 3.906250e-03 : f32
    %12 = vector.broadcast %cst_4 : f32 to vector<16x1xf32>
    %13 = arith.mulf %11, %12 : vector<16x1xf32>
    %14 = tpu.concatenate %13, %13, %13, %13 in 0 : vector<16x1xf32>, vector<16x1xf32>, vector<16x1xf32>, vector<16x1xf32> -> vector<64x1xf32>
    %15 = vector.broadcast %14 : vector<64x1xf32> to vector<64x64xf32>
    %16 = arith.subf %2, %15 : vector<64x64xf32>
    %17 = arith.mulf %16, %16 : vector<64x64xf32>
    %cst_5 = arith.constant dense<0.000000e+00> : vector<64xf32>
    %18 = vector.multi_reduction <add>, %17, %cst_5 [1] : vector<64x64xf32> to vector<64xf32>
    %19 = vector.shape_cast %18 : vector<64xf32> to vector<64x1xf32>
    %20 = vector.extract_strided_slice %19 {offsets = [0, 0], sizes = [16, 1], strides = [1, 1]} : vector<64x1xf32> to vector<16x1xf32>
    %21 = vector.extract_strided_slice %19 {offsets = [16, 0], sizes = [16, 1], strides = [1, 1]} : vector<64x1xf32> to vector<16x1xf32>
    %22 = arith.addf %20, %21 : vector<16x1xf32>
    %23 = vector.extract_strided_slice %19 {offsets = [32, 0], sizes = [16, 1], strides = [1, 1]} : vector<64x1xf32> to vector<16x1xf32>
    %24 = arith.addf %22, %23 : vector<16x1xf32>
    %25 = vector.extract_strided_slice %19 {offsets = [48, 0], sizes = [16, 1], strides = [1, 1]} : vector<64x1xf32> to vector<16x1xf32>
    %26 = arith.addf %24, %25 : vector<16x1xf32>
    %cst_6 = arith.constant 3.906250e-03 : f32
    %27 = vector.broadcast %cst_6 : f32 to vector<16x1xf32>
    %28 = arith.mulf %26, %27 : vector<16x1xf32>
    %c0_7 = arith.constant 0 : index
    %c0_8 = arith.constant 0 : index
    %29 = vector.load %arg2[%c0_7, %c0_8] : memref<16x1xf32, #tpu.memory_space<vmem>>, vector<16x1xf32>
    %cst_9 = arith.constant 9.99999974E-6 : f32
    %30 = vector.broadcast %cst_9 : f32 to vector<16x1xf32>
    %31 = arith.addf %28, %30 : vector<16x1xf32>
    %32 = math.rsqrt %31 : vector<16x1xf32>
    %33 = arith.mulf %29, %32 : vector<16x1xf32>
    %c0_10 = arith.constant 0 : index
    %c0_11 = arith.constant 0 : index
    %34 = vector.load %arg3[%c0_10, %c0_11] : memref<16x1xf32, #tpu.memory_space<vmem>>, vector<16x1xf32>
    %35 = arith.mulf %13, %33 : vector<16x1xf32>
    %36 = arith.subf %34, %35 : vector<16x1xf32>
    %37 = tpu.concatenate %33, %33, %33, %33 in 0 : vector<16x1xf32>, vector<16x1xf32>, vector<16x1xf32>, vector<16x1xf32> -> vector<64x1xf32>
    %38 = tpu.concatenate %36, %36, %36, %36 in 0 : vector<16x1xf32>, vector<16x1xf32>, vector<16x1xf32>, vector<16x1xf32> -> vector<64x1xf32>
    %39 = vector.broadcast %37 : vector<64x1xf32> to vector<64x64xf32>
    %40 = arith.mulf %2, %39 : vector<64x64xf32>
    %41 = vector.broadcast %38 : vector<64x1xf32> to vector<64x64xf32>
    %42 = arith.addf %40, %41 : vector<64x64xf32>
    %cst_12 = arith.constant 0.000000e+00 : f32
    %43 = vector.broadcast %cst_12 : f32 to vector<64x64xf32>
    %44 = arith.maximumf %42, %43 : vector<64x64xf32>
    %45 = arith.truncf %44 : vector<64x64xf32> to vector<64x64xbf16>
    %c0_13 = arith.constant 0 : index
    %c0_14 = arith.constant 0 : index
    %46 = vector.load %arg4[%c0_13, %c0_14] : memref<64x64xbf16, #tpu.memory_space<vmem>>, vector<64x64xbf16>
    tpu.vector_store %arg4[%c0_13, %c0_14], %45 {strides = array<i32>} : memref<64x64xbf16, #tpu.memory_space<vmem>>, vector<64x64xbf16>,
    return
  }
}

module attributes {stable_mosaic.version = 11 : i64} {
  func.func @_gemm_bn_act_kernel(%arg0: memref<32x144xbf16, #tpu.memory_space<vmem>>, %arg1: memref<144x256xbf16, #tpu.memory_space<vmem>>, %arg2: memref<8x1xf32, #tpu.memory_space<vmem>>, %arg3: memref<8x1xf32, #tpu.memory_space<vmem>>, %arg4: memref<32x256xbf16, #tpu.memory_space<vmem>>) attributes {dimension_semantics = [], scalar_prefetch = 0 : i64, scratch_operands = 0 : i64, tpu.core_type = #tpu.core_type<tc>} {
    %c0 = arith.constant 0 : index
    %c0_0 = arith.constant 0 : index
    %0 = vector.load %arg0[%c0, %c0_0] : memref<32x144xbf16, #tpu.memory_space<vmem>>, vector<32x144xbf16>
    %c0_1 = arith.constant 0 : index
    %c0_2 = arith.constant 0 : index
    %1 = vector.load %arg1[%c0_1, %c0_2] : memref<144x256xbf16, #tpu.memory_space<vmem>>, vector<144x256xbf16>
    %cst = arith.constant dense<0.000000e+00> : vector<32x256xf32>
    %2 = tpu.matmul %0, %1, %cst {dimension_numbers = #tpu.dot_dimension_numbers<[1], [0], [0], [1], [0, 0, 1, 1], [], []>} : vector<32x144xbf16>, vector<144x256xbf16>, vector<32x256xf32> -> vector<32x256xf32>
    %cst_3 = arith.constant dense<0.000000e+00> : vector<32xf32>
    %3 = vector.multi_reduction <add>, %2, %cst_3 [1] : vector<32x256xf32> to vector<32xf32>
    %4 = vector.shape_cast %3 : vector<32xf32> to vector<32x1xf32>
    %5 = vector.extract_strided_slice %4 {offsets = [0, 0], sizes = [8, 1], strides = [1, 1]} : vector<32x1xf32> to vector<8x1xf32>
    %6 = vector.extract_strided_slice %4 {offsets = [8, 0], sizes = [8, 1], strides = [1, 1]} : vector<32x1xf32> to vector<8x1xf32>
    %7 = arith.addf %5, %6 : vector<8x1xf32>
    %8 = vector.extract_strided_slice %4 {offsets = [16, 0], sizes = [8, 1], strides = [1, 1]} : vector<32x1xf32> to vector<8x1xf32>
    %9 = arith.addf %7, %8 : vector<8x1xf32>
    %10 = vector.extract_strided_slice %4 {offsets = [24, 0], sizes = [8, 1], strides = [1, 1]} : vector<32x1xf32> to vector<8x1xf32>
    %11 = arith.addf %9, %10 : vector<8x1xf32>
    %cst_4 = arith.constant 9.765625E-4 : f32
    %12 = vector.broadcast %cst_4 : f32 to vector<8x1xf32>
    %13 = arith.mulf %11, %12 : vector<8x1xf32>
    %14 = tpu.concatenate %13, %13, %13, %13 in 0 : vector<8x1xf32>, vector<8x1xf32>, vector<8x1xf32>, vector<8x1xf32> -> vector<32x1xf32>
    %15 = vector.broadcast %14 : vector<32x1xf32> to vector<32x256xf32>
    %16 = arith.subf %2, %15 : vector<32x256xf32>
    %17 = arith.mulf %16, %16 : vector<32x256xf32>
    %cst_5 = arith.constant dense<0.000000e+00> : vector<32xf32>
    %18 = vector.multi_reduction <add>, %17, %cst_5 [1] : vector<32x256xf32> to vector<32xf32>
    %19 = vector.shape_cast %18 : vector<32xf32> to vector<32x1xf32>
    %20 = vector.extract_strided_slice %19 {offsets = [0, 0], sizes = [8, 1], strides = [1, 1]} : vector<32x1xf32> to vector<8x1xf32>
    %21 = vector.extract_strided_slice %19 {offsets = [8, 0], sizes = [8, 1], strides = [1, 1]} : vector<32x1xf32> to vector<8x1xf32>
    %22 = arith.addf %20, %21 : vector<8x1xf32>
    %23 = vector.extract_strided_slice %19 {offsets = [16, 0], sizes = [8, 1], strides = [1, 1]} : vector<32x1xf32> to vector<8x1xf32>
    %24 = arith.addf %22, %23 : vector<8x1xf32>
    %25 = vector.extract_strided_slice %19 {offsets = [24, 0], sizes = [8, 1], strides = [1, 1]} : vector<32x1xf32> to vector<8x1xf32>
    %26 = arith.addf %24, %25 : vector<8x1xf32>
    %cst_6 = arith.constant 9.765625E-4 : f32
    %27 = vector.broadcast %cst_6 : f32 to vector<8x1xf32>
    %28 = arith.mulf %26, %27 : vector<8x1xf32>
    %c0_7 = arith.constant 0 : index
    %c0_8 = arith.constant 0 : index
    %29 = vector.load %arg2[%c0_7, %c0_8] : memref<8x1xf32, #tpu.memory_space<vmem>>, vector<8x1xf32>
    %cst_9 = arith.constant 9.99999974E-6 : f32
    %30 = vector.broadcast %cst_9 : f32 to vector<8x1xf32>
    %31 = arith.addf %28, %30 : vector<8x1xf32>
    %32 = math.rsqrt %31 : vector<8x1xf32>
    %33 = arith.mulf %29, %32 : vector<8x1xf32>
    %c0_10 = arith.constant 0 : index
    %c0_11 = arith.constant 0 : index
    %34 = vector.load %arg3[%c0_10, %c0_11] : memref<8x1xf32, #tpu.memory_space<vmem>>, vector<8x1xf32>
    %35 = arith.mulf %13, %33 : vector<8x1xf32>
    %36 = arith.subf %34, %35 : vector<8x1xf32>
    %37 = tpu.concatenate %33, %33, %33, %33 in 0 : vector<8x1xf32>, vector<8x1xf32>, vector<8x1xf32>, vector<8x1xf32> -> vector<32x1xf32>
    %38 = tpu.concatenate %36, %36, %36, %36 in 0 : vector<8x1xf32>, vector<8x1xf32>, vector<8x1xf32>, vector<8x1xf32> -> vector<32x1xf32>
    %39 = vector.broadcast %37 : vector<32x1xf32> to vector<32x256xf32>
    %40 = arith.mulf %2, %39 : vector<32x256xf32>
    %41 = vector.broadcast %38 : vector<32x1xf32> to vector<32x256xf32>
    %42 = arith.addf %40, %41 : vector<32x256xf32>
    %cst_12 = arith.constant 0.000000e+00 : f32
    %43 = vector.broadcast %cst_12 : f32 to vector<32x256xf32>
    %44 = arith.maximumf %42, %43 : vector<32x256xf32>
    %45 = arith.truncf %44 : vector<32x256xf32> to vector<32x256xbf16>
    %c0_13 = arith.constant 0 : index
    %c0_14 = arith.constant 0 : index
    %46 = vector.load %arg4[%c0_13, %c0_14] : memref<32x256xbf16, #tpu.memory_space<vmem>>, vector<32x256xbf16>
    tpu.vector_store %arg4[%c0_13, %c0_14], %45 {strides = array<i32>} : memref<32x256xbf16, #tpu.memory_space<vmem>>, vector<32x256xbf16>,
    return
  }
}

module attributes {stable_mosaic.version = 11 : i64} {
  func.func @_gemm_bn_act_kernel(%arg0: memref<32x72xbf16, #tpu.memory_space<vmem>>, %arg1: memref<72x1024xbf16, #tpu.memory_space<vmem>>, %arg2: memref<8x1xf32, #tpu.memory_space<vmem>>, %arg3: memref<8x1xf32, #tpu.memory_space<vmem>>, %arg4: memref<32x1024xf32, #tpu.memory_space<vmem>>) attributes {dimension_semantics = [], scalar_prefetch = 0 : i64, scratch_operands = 0 : i64, tpu.core_type = #tpu.core_type<tc>} {
    %c0 = arith.constant 0 : index
    %c0_0 = arith.constant 0 : index
    %0 = vector.load %arg0[%c0, %c0_0] : memref<32x72xbf16, #tpu.memory_space<vmem>>, vector<32x72xbf16>
    %c0_1 = arith.constant 0 : index
    %c0_2 = arith.constant 0 : index
    %1 = vector.load %arg1[%c0_1, %c0_2] : memref<72x1024xbf16, #tpu.memory_space<vmem>>, vector<72x1024xbf16>
    %cst = arith.constant dense<0.000000e+00> : vector<32x1024xf32>
    %2 = tpu.matmul %0, %1, %cst {dimension_numbers = #tpu.dot_dimension_numbers<[1], [0], [0], [1], [0, 0, 1, 1], [], []>} : vector<32x72xbf16>, vector<72x1024xbf16>, vector<32x1024xf32> -> vector<32x1024xf32>
    %cst_3 = arith.constant dense<0.000000e+00> : vector<32xf32>
    %3 = vector.multi_reduction <add>, %2, %cst_3 [1] : vector<32x1024xf32> to vector<32xf32>
    %4 = vector.shape_cast %3 : vector<32xf32> to vector<32x1xf32>
    %5 = vector.extract_strided_slice %4 {offsets = [0, 0], sizes = [8, 1], strides = [1, 1]} : vector<32x1xf32> to vector<8x1xf32>
    %6 = vector.extract_strided_slice %4 {offsets = [8, 0], sizes = [8, 1], strides = [1, 1]} : vector<32x1xf32> to vector<8x1xf32>
    %7 = arith.addf %5, %6 : vector<8x1xf32>
    %8 = vector.extract_strided_slice %4 {offsets = [16, 0], sizes = [8, 1], strides = [1, 1]} : vector<32x1xf32> to vector<8x1xf32>
    %9 = arith.addf %7, %8 : vector<8x1xf32>
    %10 = vector.extract_strided_slice %4 {offsets = [24, 0], sizes = [8, 1], strides = [1, 1]} : vector<32x1xf32> to vector<8x1xf32>
    %11 = arith.addf %9, %10 : vector<8x1xf32>
    %cst_4 = arith.constant 2.44140625E-4 : f32
    %12 = vector.broadcast %cst_4 : f32 to vector<8x1xf32>
    %13 = arith.mulf %11, %12 : vector<8x1xf32>
    %14 = tpu.concatenate %13, %13, %13, %13 in 0 : vector<8x1xf32>, vector<8x1xf32>, vector<8x1xf32>, vector<8x1xf32> -> vector<32x1xf32>
    %15 = vector.broadcast %14 : vector<32x1xf32> to vector<32x1024xf32>
    %16 = arith.subf %2, %15 : vector<32x1024xf32>
    %17 = arith.mulf %16, %16 : vector<32x1024xf32>
    %cst_5 = arith.constant dense<0.000000e+00> : vector<32xf32>
    %18 = vector.multi_reduction <add>, %17, %cst_5 [1] : vector<32x1024xf32> to vector<32xf32>
    %19 = vector.shape_cast %18 : vector<32xf32> to vector<32x1xf32>
    %20 = vector.extract_strided_slice %19 {offsets = [0, 0], sizes = [8, 1], strides = [1, 1]} : vector<32x1xf32> to vector<8x1xf32>
    %21 = vector.extract_strided_slice %19 {offsets = [8, 0], sizes = [8, 1], strides = [1, 1]} : vector<32x1xf32> to vector<8x1xf32>
    %22 = arith.addf %20, %21 : vector<8x1xf32>
    %23 = vector.extract_strided_slice %19 {offsets = [16, 0], sizes = [8, 1], strides = [1, 1]} : vector<32x1xf32> to vector<8x1xf32>
    %24 = arith.addf %22, %23 : vector<8x1xf32>
    %25 = vector.extract_strided_slice %19 {offsets = [24, 0], sizes = [8, 1], strides = [1, 1]} : vector<32x1xf32> to vector<8x1xf32>
    %26 = arith.addf %24, %25 : vector<8x1xf32>
    %cst_6 = arith.constant 2.44140625E-4 : f32
    %27 = vector.broadcast %cst_6 : f32 to vector<8x1xf32>
    %28 = arith.mulf %26, %27 : vector<8x1xf32>
    %c0_7 = arith.constant 0 : index
    %c0_8 = arith.constant 0 : index
    %29 = vector.load %arg2[%c0_7, %c0_8] : memref<8x1xf32, #tpu.memory_space<vmem>>, vector<8x1xf32>
    %cst_9 = arith.constant 9.99999974E-6 : f32
    %30 = vector.broadcast %cst_9 : f32 to vector<8x1xf32>
    %31 = arith.addf %28, %30 : vector<8x1xf32>
    %32 = math.rsqrt %31 : vector<8x1xf32>
    %33 = arith.mulf %29, %32 : vector<8x1xf32>
    %c0_10 = arith.constant 0 : index
    %c0_11 = arith.constant 0 : index
    %34 = vector.load %arg3[%c0_10, %c0_11] : memref<8x1xf32, #tpu.memory_space<vmem>>, vector<8x1xf32>
    %35 = arith.mulf %13, %33 : vector<8x1xf32>
    %36 = arith.subf %34, %35 : vector<8x1xf32>
    %37 = tpu.concatenate %33, %33, %33, %33 in 0 : vector<8x1xf32>, vector<8x1xf32>, vector<8x1xf32>, vector<8x1xf32> -> vector<32x1xf32>
    %38 = tpu.concatenate %36, %36, %36, %36 in 0 : vector<8x1xf32>, vector<8x1xf32>, vector<8x1xf32>, vector<8x1xf32> -> vector<32x1xf32>
    %39 = vector.broadcast %37 : vector<32x1xf32> to vector<32x1024xf32>
    %40 = arith.mulf %2, %39 : vector<32x1024xf32>
    %41 = vector.broadcast %38 : vector<32x1xf32> to vector<32x1024xf32>
    %42 = arith.addf %40, %41 : vector<32x1024xf32>
    %43 = math.tanh %42 : vector<32x1024xf32>
    %c0_12 = arith.constant 0 : index
    %c0_13 = arith.constant 0 : index
    %44 = vector.load %arg4[%c0_12, %c0_13] : memref<32x1024xf32, #tpu.memory_space<vmem>>, vector<32x1024xf32>
    tpu.vector_store %arg4[%c0_12, %c0_13], %43 {strides = array<i32>} : memref<32x1024xf32, #tpu.memory_space<vmem>>, vector<32x1024xf32>,
    return
  }
}

</mosaic_0001>

<llo_original>
// kernel: fcn_forward.6
$region0: #{fcn_forward.6}
  #allocation0 [shape = 'u32[]', space=smem, size = 0x4, offset = 0x4, fixed_abs, tag = 'smem constant byte address 0x4 - core index']
  #allocation1 [shape = 'u32[72,128]{1,0:T(1,128)}', space=vmem, size = 0x9000, scoped, tag = 'internal scratch']
  %s0 = inlined_call_operand.vmem [shape: bf16[8,48], index: 0, kind: input, shape index: {}]
  %s1 = inlined_call_operand.vmem [shape: bf16[48,1024], index: 1, kind: input, shape index: {}]
  %s2 = inlined_call_operand.vmem [shape: f32[8,1], index: 2, kind: input, shape index: {}]
  %s3 = inlined_call_operand.vmem [shape: f32[8,1], index: 3, kind: input, shape index: {}]
  %s4 = inlined_call_operand.vmem [shape: bf16[8,1024], index: 4, kind: output, shape index: {}]
  %s5 = sld [smem:[#allocation0]]
  $region26: #{fcn_forward.6} parent=0
    _
  %s7 = ssub.s32 1, %s5
  %s8 = scalar_select 0, %s7, %s5
  // Predicated region
  $region2: #{fcn_forward.6} parent=0 // pred_check
    _
  $region3: #{fcn_forward.6} parent=0 // pred_check_branch
    %10 = sbr.rel (0) target = $region5
  $region4: #{fcn_forward.6} parent=0 // pred_region
    _
  $region5: #{fcn_forward.6} parent=0 // pred_fallthru
    _
  // Predicated region
  $region6: #{fcn_forward.6} parent=0 // pred_check
    _
  $region7: #{fcn_forward.6} parent=0 // pred_check_branch
    %12 = sbr.rel (0) target = $region9
  $region8: #{fcn_forward.6} parent=0 // pred_region
    _
  $region9: #{fcn_forward.6} parent=0 // pred_fallthru
    _
  // Predicated region
  $region10: #{fcn_forward.6} parent=0 // pred_check
    _
  $region11: #{fcn_forward.6} parent=0 // pred_check_branch
    %14 = sbr.rel (0) target = $region13
  $region12: #{fcn_forward.6} parent=0 // pred_region
    _
  $region13: #{fcn_forward.6} parent=0 // pred_fallthru
    _
  // Predicated region
  $region14: #{fcn_forward.6} parent=0 // pred_check
    _
  $region15: #{fcn_forward.6} parent=0 // pred_check_branch
    %16 = sbr.rel (0) target = $region17
  $region16: #{fcn_forward.6} parent=0 // pred_region
    _
  $region17: #{fcn_forward.6} parent=0 // pred_fallthru
    _
  %v18 = vld [vmem:[%s0] sm:$0xf]
  %v19 = vld [vmem:[%s1] sm:$0xff]
  %v20 = vld [vmem:[%s1 + $0x8] sm:$0xff]
  %v21 = vld [vmem:[%s1 + $0x10] sm:$0xff]
  %v22 = vld [vmem:[%s1 + $0x18] sm:$0xff]
  %v23 = vld [vmem:[%s1 + $0x20] sm:$0xff]
  %v24 = vld [vmem:[%s1 + $0x28] sm:$0xff]
  %v25 = vld [vmem:[%s1 + $0x30] sm:$0xff]
  %v26 = vld [vmem:[%s1 + $0x38] sm:$0xff]
  %v27 = vld [vmem:[%s1 + $0x40] sm:$0xff]
  %v28 = vld [vmem:[%s1 + $0x48] sm:$0xff]
  %v29 = vld [vmem:[%s1 + $0x50] sm:$0xff]
  %v30 = vld [vmem:[%s1 + $0x58] sm:$0xff]
  %v31 = vld [vmem:[%s1 + $0x60] sm:$0xff]
  %v32 = vld [vmem:[%s1 + $0x68] sm:$0xff]
  %v33 = vld [vmem:[%s1 + $0x70] sm:$0xff]
  %v34 = vld [vmem:[%s1 + $0x78] sm:$0xff]
  %v35 = vld [vmem:[%s1 + $0x80] sm:$0xff]
  %v36 = vld [vmem:[%s1 + $0x88] sm:$0xff]
  %v37 = vld [vmem:[%s1 + $0x90] sm:$0xff]
  %v38 = vld [vmem:[%s1 + $0x98] sm:$0xff]
  %v39 = vld [vmem:[%s1 + $0xa0] sm:$0xff]
  %v40 = vld [vmem:[%s1 + $0xa8] sm:$0xff]
  %v41 = vld [vmem:[%s1 + $0xb0] sm:$0xff]
  %v42 = vld [vmem:[%s1 + $0xb8] sm:$0xff]
  %v67 = vunpack.c.l.b16 %v19
  %v68 = vunpack.c.h.b16 %v19
  %v69 = vunpack.c.l.b16 %v20
  %v70 = vunpack.c.h.b16 %v20
  %v71 = vunpack.c.l.b16 %v21
  %v72 = vunpack.c.h.b16 %v21
  %v73 = vunpack.c.l.b16 %v22
  %v74 = vunpack.c.h.b16 %v22
  %v75 = vunpack.c.l.b16 %v23
  %v76 = vunpack.c.h.b16 %v23
  %v77 = vunpack.c.l.b16 %v24
  %v78 = vunpack.c.h.b16 %v24
  %v79 = vunpack.c.l.b16 %v25
  %v80 = vunpack.c.h.b16 %v25
  %v81 = vunpack.c.l.b16 %v26
  %v82 = vunpack.c.h.b16 %v26
  %v83 = vunpack.c.l.b16 %v27
  %v84 = vunpack.c.h.b16 %v27
  %v85 = vunpack.c.l.b16 %v28
  %v86 = vunpack.c.h.b16 %v28
  %v87 = vunpack.c.l.b16 %v29
  %v88 = vunpack.c.h.b16 %v29
  %v89 = vunpack.c.l.b16 %v30
  %v90 = vunpack.c.h.b16 %v30
  %v91 = vunpack.c.l.b16 %v31
  %v92 = vunpack.c.h.b16 %v31
  %v93 = vunpack.c.l.b16 %v32
  %v94 = vunpack.c.h.b16 %v32
  %v95 = vunpack.c.l.b16 %v33
  %v96 = vunpack.c.h.b16 %v33
  %v97 = vunpack.c.l.b16 %v34
  %v98 = vunpack.c.h.b16 %v34
  %v99 = vunpack.c.l.b16 %v35
  %v100 = vunpack.c.h.b16 %v35
  %v101 = vunpack.c.l.b16 %v36
  %v102 = vunpack.c.h.b16 %v36
  %v103 = vunpack.c.l.b16 %v37
  %v104 = vunpack.c.h.b16 %v37
  %v105 = vunpack.c.l.b16 %v38
  %v106 = vunpack.c.h.b16 %v38
  %v107 = vunpack.c.l.b16 %v39
  %v108 = vunpack.c.h.b16 %v39
  %v109 = vunpack.c.l.b16 %v40
  %v110 = vunpack.c.h.b16 %v40
  %v111 = vunpack.c.l.b16 %v41
  %v112 = vunpack.c.h.b16 %v41
  %v113 = vunpack.c.l.b16 %v42
  %v114 = vunpack.c.h.b16 %v42
  %v115 = vpack.c.b16 %v75, %v67
  %v116 = vpack.c.b16 %v76, %v68
  %v117 = vpack.c.b16 %v77, %v69
  %v118 = vpack.c.b16 %v78, %v70
  %v119 = vpack.c.b16 %v79, %v71
  %v120 = vpack.c.b16 %v80, %v72
  %v121 = vpack.c.b16 %v81, %v73
  %v122 = vpack.c.b16 %v82, %v74
  %v123 = vpack.c.b16 %v91, %v83
  %v124 = vpack.c.b16 %v92, %v84
  %v125 = vpack.c.b16 %v93, %v85
  %v126 = vpack.c.b16 %v94, %v86
  %v127 = vpack.c.b16 %v95, %v87
  %v128 = vpack.c.b16 %v96, %v88
  %v129 = vpack.c.b16 %v97, %v89
  %v130 = vpack.c.b16 %v98, %v90
  %v131 = vpack.c.b16 %v107, %v99
  %v132 = vpack.c.b16 %v108, %v100
  %v133 = vpack.c.b16 %v109, %v101
  %v134 = vpack.c.b16 %v110, %v102
  %v135 = vpack.c.b16 %v111, %v103
  %v136 = vpack.c.b16 %v112, %v104
  %v137 = vpack.c.b16 %v113, %v105
  %v138 = vpack.c.b16 %v114, %v106
  %vm163 = vcmask 392192
  %v165 = vsel %vm163, %v18, 0
  %167 = vmatpush.bf16.msra.mxu0 0
  %168 = vmatpush.bf16.msra.mxu0 0
  %169 = vmatpush.bf16.msra.mxu0 0
  %170 = vmatpush.bf16.msra.mxu0 0
  %171 = vmatpush.bf16.msra.mxu0 0
  %172 = vmatpush.bf16.msra.mxu0 %v131
  %173 = vmatpush.bf16.msra.mxu0 %v123
  %174 = vmatpush.bf16.msra.mxu0 %v115
  %175 = vmatmul.bf16.gmra.mxu0 %v165
  %v176 = vpop.f32.mrf.mxu0
  %v177 = vadd.f32 0.0, %v176
  %v178 = vpop.f32.mrf.mxu0
  %179 = vdwg.mxu0
  %180 = vmatpush.bf16.msra.mxu0 0
  %181 = vmatpush.bf16.msra.mxu0 0
  %182 = vmatpush.bf16.msra.mxu0 0
  %183 = vmatpush.bf16.msra.mxu0 0
  %184 = vmatpush.bf16.msra.mxu0 0
  %185 = vmatpush.bf16.msra.mxu0 %v132
  %186 = vmatpush.bf16.msra.mxu0 %v124
  %187 = vmatpush.bf16.msra.mxu0 %v116
  %188 = vmatmul.bf16.gmra.mxu0 %v165
  %v189 = vpop.f32.mrf.mxu0
  %v190 = vadd.f32 0.0, %v189
  %v191 = vpop.f32.mrf.mxu0
  %192 = vdwg.mxu0
  %193 = vmatpush.bf16.msra.mxu0 0
  %194 = vmatpush.bf16.msra.mxu0 0
  %195 = vmatpush.bf16.msra.mxu0 0
  %196 = vmatpush.bf16.msra.mxu0 0
  %197 = vmatpush.bf16.msra.mxu0 0
  %198 = vmatpush.bf16.msra.mxu0 %v133
  %199 = vmatpush.bf16.msra.mxu0 %v125
  %200 = vmatpush.bf16.msra.mxu0 %v117
  %201 = vmatmul.bf16.gmra.mxu0 %v165
  %v202 = vpop.f32.mrf.mxu0
  %v203 = vadd.f32 0.0, %v202
  %v204 = vpop.f32.mrf.mxu0
  %205 = vdwg.mxu0
  %206 = vmatpush.bf16.msra.mxu0 0
  %207 = vmatpush.bf16.msra.mxu0 0
  %208 = vmatpush.bf16.msra.mxu0 0
  %209 = vmatpush.bf16.msra.mxu0 0
  %210 = vmatpush.bf16.msra.mxu0 0
  %211 = vmatpush.bf16.msra.mxu0 %v134
  %212 = vmatpush.bf16.msra.mxu0 %v126
  %213 = vmatpush.bf16.msra.mxu0 %v118
  %214 = vmatmul.bf16.gmra.mxu0 %v165
  %v215 = vpop.f32.mrf.mxu0
  %v216 = vadd.f32 0.0, %v215
  %v217 = vpop.f32.mrf.mxu0
  %218 = vdwg.mxu0
  %219 = vmatpush.bf16.msra.mxu0 0
  %220 = vmatpush.bf16.msra.mxu0 0
  %221 = vmatpush.bf16.msra.mxu0 0
  %222 = vmatpush.bf16.msra.mxu0 0
  %223 = vmatpush.bf16.msra.mxu0 0
  %224 = vmatpush.bf16.msra.mxu0 %v135
  %225 = vmatpush.bf16.msra.mxu0 %v127
  %226 = vmatpush.bf16.msra.mxu0 %v119
  %227 = vmatmul.bf16.gmra.mxu0 %v165
  %v228 = vpop.f32.mrf.mxu0
  %v229 = vadd.f32 0.0, %v228
  %v230 = vpop.f32.mrf.mxu0
  %231 = vdwg.mxu0
  %232 = vmatpush.bf16.msra.mxu0 0
  %233 = vmatpush.bf16.msra.mxu0 0
  %234 = vmatpush.bf16.msra.mxu0 0
  %235 = vmatpush.bf16.msra.mxu0 0
  %236 = vmatpush.bf16.msra.mxu0 0
  %237 = vmatpush.bf16.msra.mxu0 %v136
  %238 = vmatpush.bf16.msra.mxu0 %v128
  %239 = vmatpush.bf16.msra.mxu0 %v120
  %240 = vmatmul.bf16.gmra.mxu0 %v165
  %v241 = vpop.f32.mrf.mxu0
  %v242 = vadd.f32 0.0, %v241
  %v243 = vpop.f32.mrf.mxu0
  %244 = vdwg.mxu0
  %245 = vmatpush.bf16.msra.mxu0 0
  %246 = vmatpush.bf16.msra.mxu0 0
  %247 = vmatpush.bf16.msra.mxu0 0
  %248 = vmatpush.bf16.msra.mxu0 0
  %249 = vmatpush.bf16.msra.mxu0 0
  %250 = vmatpush.bf16.msra.mxu0 %v137
  %251 = vmatpush.bf16.msra.mxu0 %v129
  %252 = vmatpush.bf16.msra.mxu0 %v121
  %253 = vmatmul.bf16.gmra.mxu0 %v165
  %v254 = vpop.f32.mrf.mxu0
  %v255 = vadd.f32 0.0, %v254
  %v256 = vpop.f32.mrf.mxu0
  %257 = vdwg.mxu0
  %258 = vmatpush.bf16.msra.mxu0 0
  %259 = vmatpush.bf16.msra.mxu0 0
  %260 = vmatpush.bf16.msra.mxu0 0
  %261 = vmatpush.bf16.msra.mxu0 0
  %262 = vmatpush.bf16.msra.mxu0 0
  %263 = vmatpush.bf16.msra.mxu0 %v138
  %264 = vmatpush.bf16.msra.mxu0 %v130
  %265 = vmatpush.bf16.msra.mxu0 %v122
  %266 = vmatmul.bf16.gmra.mxu0 %v165
  %v267 = vpop.f32.mrf.mxu0
  %v268 = vadd.f32 0.0, %v267
  %v269 = vpop.f32.mrf.mxu0
  %270 = vdwg.mxu0
  %v271 = vadd.f32 %v177, %v190
  %v272 = vadd.f32 %v271, %v203
  %v273 = vadd.f32 %v272, %v216
  %v274 = vadd.f32 %v273, %v229
  %v275 = vadd.f32 %v274, %v242
  %v276 = vadd.f32 %v275, %v255
  %v277 = vadd.f32 %v276, %v268
  %278 = vadd.xlane.f32.xlu0 %v277
  %v279 = vpop.xlane.xlu0 %278
  %v280 = vmul.f32 %v279, 0.0009765625
  %v281 = vsub.f32 %v177, %v280
  %v282 = vsub.f32 %v190, %v280
  %v283 = vsub.f32 %v203, %v280
  %v284 = vsub.f32 %v216, %v280
  %v285 = vsub.f32 %v229, %v280
  %v286 = vsub.f32 %v242, %v280
  %v287 = vsub.f32 %v255, %v280
  %v288 = vsub.f32 %v268, %v280
  %v289 = vmul.f32 %v281, %v281
  %v290 = vmul.f32 %v282, %v282
  %v291 = vmul.f32 %v283, %v283
  %v292 = vmul.f32 %v284, %v284
  %v293 = vmul.f32 %v285, %v285
  %v294 = vmul.f32 %v286, %v286
  %v295 = vmul.f32 %v287, %v287
  %v296 = vmul.f32 %v288, %v288
  %v297 = vadd.f32 %v289, %v290
  %v298 = vadd.f32 %v297, %v291
  %v299 = vadd.f32 %v298, %v292
  %v300 = vadd.f32 %v299, %v293
  %v301 = vadd.f32 %v300, %v294
  %v302 = vadd.f32 %v301, %v295
  %v303 = vadd.f32 %v302, %v296
  %304 = vadd.xlane.f32.xlu0 %v303
  %v305 = vpop.xlane.xlu0 %304
  %v306 = vmul.f32 %v305, 0.0009765625
  %v307 = vld [vmem:[%s2] sm:$0xff]
  %v308 = vadd.f32 %v306, 1e-05
  %v309 = vrsqrt.pop %v308
  %v310 = vmul.f32 %v309, %v308
  %v311 = vmul.f32 %v310, %v309
  %v312 = vmul.f32 0.5, %v311
  %v313 = vsub.f32 1.5, %v312
  %v314 = vmul.f32 %v309, %v313
  %vm315 = vweird.f32 %v308
  %vm316 = vweird.f32 %v309
  %vm317 = vmor %vm315, %vm316
  %v318 = vsel %vm317, %v309, %v314
  %v319 = vmul.f32 %v307, %v318
  %v320 = vld [vmem:[%s3] sm:$0xff]
  %v321 = vmul.f32 %v280, %v319
  %v322 = vsub.f32 %v320, %v321
  %324 = vset.pattern.permute.xlu0 0
  %325 = vperm.xlu0 %324, %v319
  %v326 = vpop.permute.xlu0 %325
  %v328 = vmul.f32 %v177, %v326
  %v329 = vmul.f32 %v190, %v326
  %v330 = vmul.f32 %v203, %v326
  %v331 = vmul.f32 %v216, %v326
  %v332 = vmul.f32 %v229, %v326
  %v333 = vmul.f32 %v242, %v326
  %v334 = vmul.f32 %v255, %v326
  %v335 = vmul.f32 %v268, %v326
  %337 = vset.pattern.permute.xlu0 0
  %338 = vperm.xlu0 %337, %v322
  %v339 = vpop.permute.xlu0 %338
  %v341 = vadd.f32 %v328, %v339
  %v342 = vadd.f32 %v329, %v339
  %v343 = vadd.f32 %v330, %v339
  %v344 = vadd.f32 %v331, %v339
  %v345 = vadd.f32 %v332, %v339
  %v346 = vadd.f32 %v333, %v339
  %v347 = vadd.f32 %v334, %v339
  %v348 = vadd.f32 %v335, %v339
  %v349 = vmax.f32 %v341, 0.0
  %v350 = vmax.f32 %v342, 0.0
  %v351 = vmax.f32 %v343, 0.0
  %v352 = vmax.f32 %v344, 0.0
  %v353 = vmax.f32 %v345, 0.0
  %v354 = vmax.f32 %v346, 0.0
  %v355 = vmax.f32 %v347, 0.0
  %v356 = vmax.f32 %v348, 0.0
  %v357 = vpack.c.bf16 %v350, %v349
  %v358 = vpack.c.bf16 %v352, %v351
  %v359 = vpack.c.bf16 %v354, %v353
  %v360 = vpack.c.bf16 %v356, %v355
  %361 = vst [vmem:[%s4] sm:$0xff] %v357
  %362 = vst [vmem:[%s4 + $0x8] sm:$0xff] %v358
  %363 = vst [vmem:[%s4 + $0x10] sm:$0xff] %v359
  %364 = vst [vmem:[%s4 + $0x18] sm:$0xff] %v360
  // Predicated region
  $region18: #{fcn_forward.6} parent=0 // pred_check
    _
  $region19: #{fcn_forward.6} parent=0 // pred_check_branch
    %366 = sbr.rel (0) target = $region21
  $region20: #{fcn_forward.6} parent=0 // pred_region
    _
  $region21: #{fcn_forward.6} parent=0 // pred_fallthru
    _
  // Predicated region
  $region22: #{fcn_forward.6} parent=0 // pred_check
    _
  $region23: #{fcn_forward.6} parent=0 // pred_check_branch
    %368 = sbr.rel (0) target = $region25
  $region24: #{fcn_forward.6} parent=0 // pred_region
    _
  $region25: #{fcn_forward.6} parent=0 // pred_fallthru
    _

// kernel: fcn_forward.7
$region0: #{fcn_forward.7}
  #allocation0 [shape = 'u32[]', space=smem, size = 0x4, offset = 0x4, fixed_abs, tag = 'smem constant byte address 0x4 - core index']
  #allocation1 [shape = 'u32[72,128]{1,0:T(1,128)}', space=vmem, size = 0x9000, scoped, tag = 'internal scratch']
  %s0 = inlined_call_operand.vmem [shape: bf16[16,128], index: 0, kind: input, shape index: {}]
  %s1 = inlined_call_operand.vmem [shape: bf16[128,256], index: 1, kind: input, shape index: {}]
  %s2 = inlined_call_operand.vmem [shape: f32[16,1], index: 2, kind: input, shape index: {}]
  %s3 = inlined_call_operand.vmem [shape: f32[16,1], index: 3, kind: input, shape index: {}]
  %s4 = inlined_call_operand.vmem [shape: bf16[16,256], index: 4, kind: output, shape index: {}]
  %s5 = sld [smem:[#allocation0]]
  $region26: #{fcn_forward.7} parent=0
    _
  %s7 = ssub.s32 1, %s5
  %s8 = scalar_select 0, %s7, %s5
  // Predicated region
  $region2: #{fcn_forward.7} parent=0 // pred_check
    _
  $region3: #{fcn_forward.7} parent=0 // pred_check_branch
    %10 = sbr.rel (0) target = $region5
  $region4: #{fcn_forward.7} parent=0 // pred_region
    _
  $region5: #{fcn_forward.7} parent=0 // pred_fallthru
    _
  // Predicated region
  $region6: #{fcn_forward.7} parent=0 // pred_check
    _
  $region7: #{fcn_forward.7} parent=0 // pred_check_branch
    %12 = sbr.rel (0) target = $region9
  $region8: #{fcn_forward.7} parent=0 // pred_region
    _
  $region9: #{fcn_forward.7} parent=0 // pred_fallthru
    _
  // Predicated region
  $region10: #{fcn_forward.7} parent=0 // pred_check
    _
  $region11: #{fcn_forward.7} parent=0 // pred_check_branch
    %14 = sbr.rel (0) target = $region13
  $region12: #{fcn_forward.7} parent=0 // pred_region
    _
  $region13: #{fcn_forward.7} parent=0 // pred_fallthru
    _
  // Predicated region
  $region14: #{fcn_forward.7} parent=0 // pred_check
    _
  $region15: #{fcn_forward.7} parent=0 // pred_check_branch
    %16 = sbr.rel (0) target = $region17
  $region16: #{fcn_forward.7} parent=0 // pred_region
    _
  $region17: #{fcn_forward.7} parent=0 // pred_fallthru
    _
  %v17 = vld [vmem:[%s0] sm:$0xf]
  %v18 = vld [vmem:[%s0 + $0x4] sm:$0xf]
  %v19 = vld [vmem:[%s1] sm:$0xff]
  %v20 = vld [vmem:[%s1 + $0x8] sm:$0xff]
  %v21 = vld [vmem:[%s1 + $0x10] sm:$0xff]
  %v22 = vld [vmem:[%s1 + $0x18] sm:$0xff]
  %v23 = vld [vmem:[%s1 + $0x20] sm:$0xff]
  %v24 = vld [vmem:[%s1 + $0x28] sm:$0xff]
  %v25 = vld [vmem:[%s1 + $0x30] sm:$0xff]
  %v26 = vld [vmem:[%s1 + $0x38] sm:$0xff]
  %v27 = vld [vmem:[%s1 + $0x40] sm:$0xff]
  %v28 = vld [vmem:[%s1 + $0x48] sm:$0xff]
  %v29 = vld [vmem:[%s1 + $0x50] sm:$0xff]
  %v30 = vld [vmem:[%s1 + $0x58] sm:$0xff]
  %v31 = vld [vmem:[%s1 + $0x60] sm:$0xff]
  %v32 = vld [vmem:[%s1 + $0x68] sm:$0xff]
  %v33 = vld [vmem:[%s1 + $0x70] sm:$0xff]
  %v34 = vld [vmem:[%s1 + $0x78] sm:$0xff]
  %v37 = vunpack.c.l.b16 %v17
  %v38 = vunpack.c.l.b16 %v18
  %v39 = vpack.c.b16 %v38, %v37
  %v57 = vunpack.c.l.b16 %v19
  %v58 = vunpack.c.h.b16 %v19
  %v59 = vunpack.c.l.b16 %v20
  %v60 = vunpack.c.h.b16 %v20
  %v61 = vunpack.c.l.b16 %v21
  %v62 = vunpack.c.h.b16 %v21
  %v63 = vunpack.c.l.b16 %v22
  %v64 = vunpack.c.h.b16 %v22
  %v65 = vunpack.c.l.b16 %v23
  %v66 = vunpack.c.h.b16 %v23
  %v67 = vunpack.c.l.b16 %v24
  %v68 = vunpack.c.h.b16 %v24
  %v69 = vunpack.c.l.b16 %v25
  %v70 = vunpack.c.h.b16 %v25
  %v71 = vunpack.c.l.b16 %v26
  %v72 = vunpack.c.h.b16 %v26
  %v73 = vunpack.c.l.b16 %v27
  %v74 = vunpack.c.h.b16 %v27
  %v75 = vunpack.c.l.b16 %v28
  %v76 = vunpack.c.h.b16 %v28
  %v77 = vunpack.c.l.b16 %v29
  %v78 = vunpack.c.h.b16 %v29
  %v79 = vunpack.c.l.b16 %v30
  %v80 = vunpack.c.h.b16 %v30
  %v81 = vunpack.c.l.b16 %v31
  %v82 = vunpack.c.h.b16 %v31
  %v83 = vunpack.c.l.b16 %v32
  %v84 = vunpack.c.h.b16 %v32
  %v85 = vunpack.c.l.b16 %v33
  %v86 = vunpack.c.h.b16 %v33
  %v87 = vunpack.c.l.b16 %v34
  %v88 = vunpack.c.h.b16 %v34
  %v89 = vpack.c.b16 %v59, %v57
  %v90 = vpack.c.b16 %v60, %v58
  %v91 = vpack.c.b16 %v63, %v61
  %v92 = vpack.c.b16 %v64, %v62
  %v93 = vpack.c.b16 %v67, %v65
  %v94 = vpack.c.b16 %v68, %v66
  %v95 = vpack.c.b16 %v71, %v69
  %v96 = vpack.c.b16 %v72, %v70
  %v97 = vpack.c.b16 %v75, %v73
  %v98 = vpack.c.b16 %v76, %v74
  %v99 = vpack.c.b16 %v79, %v77
  %v100 = vpack.c.b16 %v80, %v78
  %v101 = vpack.c.b16 %v83, %v81
  %v102 = vpack.c.b16 %v84, %v82
  %v103 = vpack.c.b16 %v87, %v85
  %v104 = vpack.c.b16 %v88, %v86
  %121 = vmatpush.bf16.msra.mxu0 %v103
  %122 = vmatpush.bf16.msra.mxu0 %v101
  %123 = vmatpush.bf16.msra.mxu0 %v99
  %124 = vmatpush.bf16.msra.mxu0 %v97
  %125 = vmatpush.bf16.msra.mxu0 %v95
  %126 = vmatpush.bf16.msra.mxu0 %v93
  %127 = vmatpush.bf16.msra.mxu0 %v91
  %128 = vmatpush.bf16.msra.mxu0 %v89
  %129 = vmatmul.bf16.gmra.mxu0 %v39
  %v130 = vpop.f32.mrf.mxu0
  %v131 = vadd.f32 0.0, %v130
  %v132 = vpop.f32.mrf.mxu0
  %v133 = vadd.f32 0.0, %v132
  %134 = vdwg.mxu0
  %135 = vmatpush.bf16.msra.mxu0 %v104
  %136 = vmatpush.bf16.msra.mxu0 %v102
  %137 = vmatpush.bf16.msra.mxu0 %v100
  %138 = vmatpush.bf16.msra.mxu0 %v98
  %139 = vmatpush.bf16.msra.mxu0 %v96
  %140 = vmatpush.bf16.msra.mxu0 %v94
  %141 = vmatpush.bf16.msra.mxu0 %v92
  %142 = vmatpush.bf16.msra.mxu0 %v90
  %143 = vmatmul.bf16.gmra.mxu0 %v39
  %v144 = vpop.f32.mrf.mxu0
  %v145 = vadd.f32 0.0, %v144
  %v146 = vpop.f32.mrf.mxu0
  %v147 = vadd.f32 0.0, %v146
  %148 = vdwg.mxu0
  %v149 = vadd.f32 %v131, %v145
  %150 = vadd.xlane.f32.xlu0 %v149
  %v151 = vpop.xlane.xlu0 %150
  %v152 = vadd.f32 %v133, %v147
  %153 = vadd.xlane.f32.xlu0 %v152
  %v154 = vpop.xlane.xlu0 %153
  %v155 = vmul.f32 %v151, 0.00390625
  %v156 = vmul.f32 %v154, 0.00390625
  %v157 = vsub.f32 %v131, %v155
  %v158 = vsub.f32 %v145, %v155
  %v159 = vsub.f32 %v133, %v156
  %v160 = vsub.f32 %v147, %v156
  %v161 = vmul.f32 %v157, %v157
  %v162 = vmul.f32 %v158, %v158
  %v163 = vmul.f32 %v159, %v159
  %v164 = vmul.f32 %v160, %v160
  %v165 = vadd.f32 %v161, %v162
  %166 = vadd.xlane.f32.xlu0 %v165
  %v167 = vpop.xlane.xlu0 %166
  %v168 = vadd.f32 %v163, %v164
  %169 = vadd.xlane.f32.xlu0 %v168
  %v170 = vpop.xlane.xlu0 %169
  %v171 = vmul.f32 %v167, 0.00390625
  %v172 = vmul.f32 %v170, 0.00390625
  %v173 = vld [vmem:[%s2] sm:$0xff]
  %v174 = vld [vmem:[%s2 + $0x8] sm:$0xff]
  %v175 = vadd.f32 %v171, 1e-05
  %v176 = vadd.f32 %v172, 1e-05
  %v177 = vrsqrt.pop %v175
  %v178 = vmul.f32 %v177, %v175
  %v179 = vmul.f32 %v178, %v177
  %v180 = vmul.f32 0.5, %v179
  %v181 = vsub.f32 1.5, %v180
  %v182 = vmul.f32 %v177, %v181
  %vm183 = vweird.f32 %v175
  %vm184 = vweird.f32 %v177
  %vm185 = vmor %vm183, %vm184
  %v186 = vsel %vm185, %v177, %v182
  %v187 = vrsqrt.pop %v176
  %v188 = vmul.f32 %v187, %v176
  %v189 = vmul.f32 %v188, %v187
  %v190 = vmul.f32 0.5, %v189
  %v191 = vsub.f32 1.5, %v190
  %v192 = vmul.f32 %v187, %v191
  %vm193 = vweird.f32 %v176
  %vm194 = vweird.f32 %v187
  %vm195 = vmor %vm193, %vm194
  %v196 = vsel %vm195, %v187, %v192
  %v197 = vmul.f32 %v173, %v186
  %v198 = vmul.f32 %v174, %v196
  %v199 = vld [vmem:[%s3] sm:$0xff]
  %v200 = vld [vmem:[%s3 + $0x8] sm:$0xff]
  %v201 = vmul.f32 %v155, %v197
  %v202 = vmul.f32 %v156, %v198
  %v203 = vsub.f32 %v199, %v201
  %v204 = vsub.f32 %v200, %v202
  %206 = vset.pattern.permute.xlu0 0
  %207 = vperm.xlu0 %206, %v197
  %v208 = vpop.permute.xlu0 %207
  %211 = vset.pattern.permute.xlu0 0
  %212 = vperm.xlu0 %211, %v198
  %v213 = vpop.permute.xlu0 %212
  %v215 = vmul.f32 %v131, %v208
  %v216 = vmul.f32 %v145, %v208
  %v217 = vmul.f32 %v133, %v213
  %v218 = vmul.f32 %v147, %v213
  %220 = vset.pattern.permute.xlu0 0
  %221 = vperm.xlu0 %220, %v203
  %v222 = vpop.permute.xlu0 %221
  %225 = vset.pattern.permute.xlu0 0
  %226 = vperm.xlu0 %225, %v204
  %v227 = vpop.permute.xlu0 %226
  %v229 = vadd.f32 %v215, %v222
  %v230 = vadd.f32 %v216, %v222
  %v231 = vadd.f32 %v217, %v227
  %v232 = vadd.f32 %v218, %v227
  %v233 = vmax.f32 %v229, 0.0
  %v234 = vmax.f32 %v230, 0.0
  %v235 = vmax.f32 %v231, 0.0
  %v236 = vmax.f32 %v232, 0.0
  %v237 = vpack.c.bf16 %v234, %v233
  %v238 = vpack.c.bf16 %v236, %v235
  %239 = vst [vmem:[%s4] sm:$0xff] %v237
  %240 = vst [vmem:[%s4 + $0x8] sm:$0xff] %v238
  // Predicated region
  $region18: #{fcn_forward.7} parent=0 // pred_check
    _
  $region19: #{fcn_forward.7} parent=0 // pred_check_branch
    %242 = sbr.rel (0) target = $region21
  $region20: #{fcn_forward.7} parent=0 // pred_region
    _
  $region21: #{fcn_forward.7} parent=0 // pred_fallthru
    _
  // Predicated region
  $region22: #{fcn_forward.7} parent=0 // pred_check
    _
  $region23: #{fcn_forward.7} parent=0 // pred_check_branch
    %244 = sbr.rel (0) target = $region25
  $region24: #{fcn_forward.7} parent=0 // pred_region
    _
  $region25: #{fcn_forward.7} parent=0 // pred_fallthru
    _

// kernel: fcn_forward.8
$region0: #{fcn_forward.8}
  #allocation0 [shape = 'u32[]', space=smem, size = 0x4, offset = 0x4, fixed_abs, tag = 'smem constant byte address 0x4 - core index']
  #allocation1 [shape = 'u32[72,128]{1,0:T(1,128)}', space=vmem, size = 0x9000, scoped, tag = 'internal scratch']
  %s0 = inlined_call_operand.vmem [shape: bf16[32,256], index: 0, kind: input, shape index: {}]
  %s1 = inlined_call_operand.vmem [shape: bf16[256,64], index: 1, kind: input, shape index: {}]
  %s2 = inlined_call_operand.vmem [shape: f32[32,1], index: 2, kind: input, shape index: {}]
  %s3 = inlined_call_operand.vmem [shape: f32[32,1], index: 3, kind: input, shape index: {}]
  %s4 = inlined_call_operand.vmem [shape: bf16[32,64], index: 4, kind: output, shape index: {}]
  %s5 = sld [smem:[#allocation0]]
  $region26: #{fcn_forward.8} parent=0
    _
  %s7 = ssub.s32 1, %s5
  %s8 = scalar_select 0, %s7, %s5
  // Predicated region
  $region2: #{fcn_forward.8} parent=0 // pred_check
    _
  $region3: #{fcn_forward.8} parent=0 // pred_check_branch
    %10 = sbr.rel (0) target = $region5
  $region4: #{fcn_forward.8} parent=0 // pred_region
    _
  $region5: #{fcn_forward.8} parent=0 // pred_fallthru
    _
  // Predicated region
  $region6: #{fcn_forward.8} parent=0 // pred_check
    _
  $region7: #{fcn_forward.8} parent=0 // pred_check_branch
    %12 = sbr.rel (0) target = $region9
  $region8: #{fcn_forward.8} parent=0 // pred_region
    _
  $region9: #{fcn_forward.8} parent=0 // pred_fallthru
    _
  // Predicated region
  $region10: #{fcn_forward.8} parent=0 // pred_check
    _
  $region11: #{fcn_forward.8} parent=0 // pred_check_branch
    %14 = sbr.rel (0) target = $region13
  $region12: #{fcn_forward.8} parent=0 // pred_region
    _
  $region13: #{fcn_forward.8} parent=0 // pred_fallthru
    _
  // Predicated region
  $region14: #{fcn_forward.8} parent=0 // pred_check
    _
  $region15: #{fcn_forward.8} parent=0 // pred_check_branch
    %16 = sbr.rel (0) target = $region17
  $region16: #{fcn_forward.8} parent=0 // pred_region
    _
  $region17: #{fcn_forward.8} parent=0 // pred_fallthru
    _
  %v17 = vld [vmem:[%s0] sm:$0xff]
  %v18 = vld [vmem:[%s0 + $0x8] sm:$0xff]
  %v19 = vld [vmem:[%s0 + $0x10] sm:$0xff]
  %v20 = vld [vmem:[%s0 + $0x18] sm:$0xff]
  %v21 = vld [vmem:[%s1] sm:$0xf]
  %v22 = vld [vmem:[%s1 + $0x4] sm:$0xf]
  %v23 = vld [vmem:[%s1 + $0x8] sm:$0xf]
  %v24 = vld [vmem:[%s1 + $0xc] sm:$0xf]
  %v25 = vld [vmem:[%s1 + $0x10] sm:$0xf]
  %v26 = vld [vmem:[%s1 + $0x14] sm:$0xf]
  %v27 = vld [vmem:[%s1 + $0x18] sm:$0xf]
  %v28 = vld [vmem:[%s1 + $0x1c] sm:$0xf]
  %v29 = vld [vmem:[%s1 + $0x20] sm:$0xf]
  %v30 = vld [vmem:[%s1 + $0x24] sm:$0xf]
  %v31 = vld [vmem:[%s1 + $0x28] sm:$0xf]
  %v32 = vld [vmem:[%s1 + $0x2c] sm:$0xf]
  %v33 = vld [vmem:[%s1 + $0x30] sm:$0xf]
  %v34 = vld [vmem:[%s1 + $0x34] sm:$0xf]
  %v35 = vld [vmem:[%s1 + $0x38] sm:$0xf]
  %v36 = vld [vmem:[%s1 + $0x3c] sm:$0xf]
  %v37 = vld [vmem:[%s1 + $0x40] sm:$0xf]
  %v38 = vld [vmem:[%s1 + $0x44] sm:$0xf]
  %v39 = vld [vmem:[%s1 + $0x48] sm:$0xf]
  %v40 = vld [vmem:[%s1 + $0x4c] sm:$0xf]
  %v41 = vld [vmem:[%s1 + $0x50] sm:$0xf]
  %v42 = vld [vmem:[%s1 + $0x54] sm:$0xf]
  %v43 = vld [vmem:[%s1 + $0x58] sm:$0xf]
  %v44 = vld [vmem:[%s1 + $0x5c] sm:$0xf]
  %v45 = vld [vmem:[%s1 + $0x60] sm:$0xf]
  %v46 = vld [vmem:[%s1 + $0x64] sm:$0xf]
  %v47 = vld [vmem:[%s1 + $0x68] sm:$0xf]
  %v48 = vld [vmem:[%s1 + $0x6c] sm:$0xf]
  %v49 = vld [vmem:[%s1 + $0x70] sm:$0xf]
  %v50 = vld [vmem:[%s1 + $0x74] sm:$0xf]
  %v51 = vld [vmem:[%s1 + $0x78] sm:$0xf]
  %v52 = vld [vmem:[%s1 + $0x7c] sm:$0xf]
  %v57 = vunpack.c.l.b16 %v17
  %v58 = vunpack.c.h.b16 %v17
  %v59 = vunpack.c.l.b16 %v18
  %v60 = vunpack.c.h.b16 %v18
  %v61 = vunpack.c.l.b16 %v19
  %v62 = vunpack.c.h.b16 %v19
  %v63 = vunpack.c.l.b16 %v20
  %v64 = vunpack.c.h.b16 %v20
  %v65 = vpack.c.b16 %v59, %v57
  %v66 = vpack.c.b16 %v60, %v58
  %v67 = vpack.c.b16 %v63, %v61
  %v68 = vpack.c.b16 %v64, %v62
  %v105 = vunpack.c.l.b16 %v21
  %v106 = vunpack.c.l.b16 %v22
  %v107 = vunpack.c.l.b16 %v23
  %v108 = vunpack.c.l.b16 %v24
  %v109 = vunpack.c.l.b16 %v25
  %v110 = vunpack.c.l.b16 %v26
  %v111 = vunpack.c.l.b16 %v27
  %v112 = vunpack.c.l.b16 %v28
  %v113 = vunpack.c.l.b16 %v29
  %v114 = vunpack.c.l.b16 %v30
  %v115 = vunpack.c.l.b16 %v31
  %v116 = vunpack.c.l.b16 %v32
  %v117 = vunpack.c.l.b16 %v33
  %v118 = vunpack.c.l.b16 %v34
  %v119 = vunpack.c.l.b16 %v35
  %v120 = vunpack.c.l.b16 %v36
  %v121 = vunpack.c.l.b16 %v37
  %v122 = vunpack.c.l.b16 %v38
  %v123 = vunpack.c.l.b16 %v39
  %v124 = vunpack.c.l.b16 %v40
  %v125 = vunpack.c.l.b16 %v41
  %v126 = vunpack.c.l.b16 %v42
  %v127 = vunpack.c.l.b16 %v43
  %v128 = vunpack.c.l.b16 %v44
  %v129 = vunpack.c.l.b16 %v45
  %v130 = vunpack.c.l.b16 %v46
  %v131 = vunpack.c.l.b16 %v47
  %v132 = vunpack.c.l.b16 %v48
  %v133 = vunpack.c.l.b16 %v49
  %v134 = vunpack.c.l.b16 %v50
  %v135 = vunpack.c.l.b16 %v51
  %v136 = vunpack.c.l.b16 %v52
  %v137 = vpack.c.b16 %v106, %v105
  %v138 = vpack.c.b16 %v108, %v107
  %v139 = vpack.c.b16 %v110, %v109
  %v140 = vpack.c.b16 %v112, %v111
  %v141 = vpack.c.b16 %v114, %v113
  %v142 = vpack.c.b16 %v116, %v115
  %v143 = vpack.c.b16 %v118, %v117
  %v144 = vpack.c.b16 %v120, %v119
  %v145 = vpack.c.b16 %v122, %v121
  %v146 = vpack.c.b16 %v124, %v123
  %v147 = vpack.c.b16 %v126, %v125
  %v148 = vpack.c.b16 %v128, %v127
  %v149 = vpack.c.b16 %v130, %v129
  %v150 = vpack.c.b16 %v132, %v131
  %v151 = vpack.c.b16 %v134, %v133
  %v152 = vpack.c.b16 %v136, %v135
  %169 = vmatpush.bf16.msra.mxu0 %v144
  %170 = vmatpush.bf16.msra.mxu0 %v143
  %171 = vmatpush.bf16.msra.mxu0 %v142
  %172 = vmatpush.bf16.msra.mxu0 %v141
  %173 = vmatpush.bf16.msra.mxu0 %v140
  %174 = vmatpush.bf16.msra.mxu0 %v139
  %175 = vmatpush.bf16.msra.mxu0 %v138
  %176 = vmatpush.bf16.msra.mxu0 %v137
  %177 = vmatmul.bf16.gmra.mxu0 %v65
  %v178 = vpop.f32.mrf.mxu0
  %v179 = vadd.f32 0.0, %v178
  %v180 = vpop.f32.mrf.mxu0
  %v181 = vadd.f32 0.0, %v180
  %182 = vmatmul.bf16.gmra.mxu0 %v67
  %v183 = vpop.f32.mrf.mxu0
  %v184 = vadd.f32 0.0, %v183
  %v185 = vpop.f32.mrf.mxu0
  %v186 = vadd.f32 0.0, %v185
  %187 = vdwg.mxu0
  %188 = vmatpush.bf16.msra.mxu0 %v152
  %189 = vmatpush.bf16.msra.mxu0 %v151
  %190 = vmatpush.bf16.msra.mxu0 %v150
  %191 = vmatpush.bf16.msra.mxu0 %v149
  %192 = vmatpush.bf16.msra.mxu0 %v148
  %193 = vmatpush.bf16.msra.mxu0 %v147
  %194 = vmatpush.bf16.msra.mxu0 %v146
  %195 = vmatpush.bf16.msra.mxu0 %v145
  %196 = vmatmul.bf16.gmra.mxu0 %v66
  %v197 = vpop.f32.mrf.mxu0
  %v198 = vadd.f32 %v179, %v197
  %v199 = vpop.f32.mrf.mxu0
  %v200 = vadd.f32 %v181, %v199
  %201 = vmatmul.bf16.gmra.mxu0 %v68
  %v202 = vpop.f32.mrf.mxu0
  %v203 = vadd.f32 %v184, %v202
  %v204 = vpop.f32.mrf.mxu0
  %v205 = vadd.f32 %v186, %v204
  %206 = vdwg.mxu0
  %vm207 = vcmask 523264
  %v208 = vsel %vm207, %v198, 0.0
  %209 = vadd.xlane.f32.xlu0 %v208
  %v210 = vpop.xlane.xlu0 %209
  %v211 = vsel %vm207, %v200, 0.0
  %212 = vadd.xlane.f32.xlu0 %v211
  %v213 = vpop.xlane.xlu0 %212
  %v214 = vsel %vm207, %v203, 0.0
  %215 = vadd.xlane.f32.xlu0 %v214
  %v216 = vpop.xlane.xlu0 %215
  %v217 = vsel %vm207, %v205, 0.0
  %218 = vadd.xlane.f32.xlu0 %v217
  %v219 = vpop.xlane.xlu0 %218
  %v220 = vmul.f32 %v210, 0.015625
  %v221 = vmul.f32 %v213, 0.015625
  %v222 = vmul.f32 %v216, 0.015625
  %v223 = vmul.f32 %v219, 0.015625
  %v224 = vsub.f32 %v198, %v220
  %v225 = vsub.f32 %v200, %v221
  %v226 = vsub.f32 %v203, %v222
  %v227 = vsub.f32 %v205, %v223
  %v228 = vmul.f32 %v224, %v224
  %v229 = vmul.f32 %v225, %v225
  %v230 = vmul.f32 %v226, %v226
  %v231 = vmul.f32 %v227, %v227
  %v232 = vsel %vm207, %v228, 0.0
  %233 = vadd.xlane.f32.xlu0 %v232
  %v234 = vpop.xlane.xlu0 %233
  %v235 = vsel %vm207, %v229, 0.0
  %236 = vadd.xlane.f32.xlu0 %v235
  %v237 = vpop.xlane.xlu0 %236
  %v238 = vsel %vm207, %v230, 0.0
  %239 = vadd.xlane.f32.xlu0 %v238
  %v240 = vpop.xlane.xlu0 %239
  %v241 = vsel %vm207, %v231, 0.0
  %242 = vadd.xlane.f32.xlu0 %v241
  %v243 = vpop.xlane.xlu0 %242
  %v244 = vmul.f32 %v234, 0.015625
  %v245 = vmul.f32 %v237, 0.015625
  %v246 = vmul.f32 %v240, 0.015625
  %v247 = vmul.f32 %v243, 0.015625
  %v248 = vld [vmem:[%s2] sm:$0xff]
  %v249 = vld [vmem:[%s2 + $0x8] sm:$0xff]
  %v250 = vld [vmem:[%s2 + $0x10] sm:$0xff]
  %v251 = vld [vmem:[%s2 + $0x18] sm:$0xff]
  %v252 = vadd.f32 %v244, 1e-05
  %v253 = vadd.f32 %v245, 1e-05
  %v254 = vadd.f32 %v246, 1e-05
  %v255 = vadd.f32 %v247, 1e-05
  %v256 = vrsqrt.pop %v252
  %v257 = vmul.f32 %v256, %v252
  %v258 = vmul.f32 %v257, %v256
  %v259 = vmul.f32 0.5, %v258
  %v260 = vsub.f32 1.5, %v259
  %v261 = vmul.f32 %v256, %v260
  %vm262 = vweird.f32 %v252
  %vm263 = vweird.f32 %v256
  %vm264 = vmor %vm262, %vm263
  %v265 = vsel %vm264, %v256, %v261
  %v266 = vrsqrt.pop %v253
  %v267 = vmul.f32 %v266, %v253
  %v268 = vmul.f32 %v267, %v266
  %v269 = vmul.f32 0.5, %v268
  %v270 = vsub.f32 1.5, %v269
  %v271 = vmul.f32 %v266, %v270
  %vm272 = vweird.f32 %v253
  %vm273 = vweird.f32 %v266
  %vm274 = vmor %vm272, %vm273
  %v275 = vsel %vm274, %v266, %v271
  %v276 = vrsqrt.pop %v254
  %v277 = vmul.f32 %v276, %v254
  %v278 = vmul.f32 %v277, %v276
  %v279 = vmul.f32 0.5, %v278
  %v280 = vsub.f32 1.5, %v279
  %v281 = vmul.f32 %v276, %v280
  %vm282 = vweird.f32 %v254
  %vm283 = vweird.f32 %v276
  %vm284 = vmor %vm282, %vm283
  %v285 = vsel %vm284, %v276, %v281
  %v286 = vrsqrt.pop %v255
  %v287 = vmul.f32 %v286, %v255
  %v288 = vmul.f32 %v287, %v286
  %v289 = vmul.f32 0.5, %v288
  %v290 = vsub.f32 1.5, %v289
  %v291 = vmul.f32 %v286, %v290
  %vm292 = vweird.f32 %v255
  %vm293 = vweird.f32 %v286
  %vm294 = vmor %vm292, %vm293
  %v295 = vsel %vm294, %v286, %v291
  %v296 = vmul.f32 %v248, %v265
  %v297 = vmul.f32 %v249, %v275
  %v298 = vmul.f32 %v250, %v285
  %v299 = vmul.f32 %v251, %v295
  %v300 = vld [vmem:[%s3] sm:$0xff]
  %v301 = vld [vmem:[%s3 + $0x8] sm:$0xff]
  %v302 = vld [vmem:[%s3 + $0x10] sm:$0xff]
  %v303 = vld [vmem:[%s3 + $0x18] sm:$0xff]
  %v304 = vmul.f32 %v220, %v296
  %v305 = vmul.f32 %v221, %v297
  %v306 = vmul.f32 %v222, %v298
  %v307 = vmul.f32 %v223, %v299
  %v308 = vsub.f32 %v300, %v304
  %v309 = vsub.f32 %v301, %v305
  %v310 = vsub.f32 %v302, %v306
  %v311 = vsub.f32 %v303, %v307
  %313 = vset.pattern.permute.xlu0 0
  %314 = vperm.xlu0 %313, %v296
  %v315 = vpop.permute.xlu0 %314
  %318 = vset.pattern.permute.xlu0 0
  %319 = vperm.xlu0 %318, %v297
  %v320 = vpop.permute.xlu0 %319
  %323 = vset.pattern.permute.xlu0 0
  %324 = vperm.xlu0 %323, %v298
  %v325 = vpop.permute.xlu0 %324
  %328 = vset.pattern.permute.xlu0 0
  %329 = vperm.xlu0 %328, %v299
  %v330 = vpop.permute.xlu0 %329
  %v332 = vmul.f32 %v198, %v315
  %v333 = vmul.f32 %v200, %v320
  %v334 = vmul.f32 %v203, %v325
  %v335 = vmul.f32 %v205, %v330
  %337 = vset.pattern.permute.xlu0 0
  %338 = vperm.xlu0 %337, %v308
  %v339 = vpop.permute.xlu0 %338
  %342 = vset.pattern.permute.xlu0 0
  %343 = vperm.xlu0 %342, %v309
  %v344 = vpop.permute.xlu0 %343
  %347 = vset.pattern.permute.xlu0 0
  %348 = vperm.xlu0 %347, %v310
  %v349 = vpop.permute.xlu0 %348
  %352 = vset.pattern.permute.xlu0 0
  %353 = vperm.xlu0 %352, %v311
  %v354 = vpop.permute.xlu0 %353
  %v356 = vadd.f32 %v332, %v339
  %v357 = vadd.f32 %v333, %v344
  %v358 = vadd.f32 %v334, %v349
  %v359 = vadd.f32 %v335, %v354
  %v360 = vmax.f32 %v356, 0.0
  %v361 = vmax.f32 %v357, 0.0
  %v362 = vmax.f32 %v358, 0.0
  %v363 = vmax.f32 %v359, 0.0
  %v364 = vpack.c.bf16 %v360, %v360
  %v365 = vpack.c.bf16 %v361, %v361
  %v366 = vpack.c.bf16 %v362, %v362
  %v367 = vpack.c.bf16 %v363, %v363
  %vm368 = vcmask 519168
  %369 = vst.msk [vmem:[%s4] sm:$0xf] %vm368, %v364
  %370 = vst.msk [vmem:[%s4 + $0x4] sm:$0xf] %vm368, %v365
  %371 = vst.msk [vmem:[%s4 + $0x8] sm:$0xf] %vm368, %v366
  %372 = vst.msk [vmem:[%s4 + $0xc] sm:$0xf] %vm368, %v367
  // Predicated region
  $region18: #{fcn_forward.8} parent=0 // pred_check
    _
  $region19: #{fcn_forward.8} parent=0 // pred_check_branch
    %374 = sbr.rel (0) target = $region21
  $region20: #{fcn_forward.8} parent=0 // pred_region
    _
  $region21: #{fcn_forward.8} parent=0 // pred_fallthru
    _
  // Predicated region
  $region22: #{fcn_forward.8} parent=0 // pred_check
    _
  $region23: #{fcn_forward.8} parent=0 // pred_check_branch
    %376 = sbr.rel (0) target = $region25
  $region24: #{fcn_forward.8} parent=0 // pred_region
    _
  $region25: #{fcn_forward.8} parent=0 // pred_fallthru
    _

// kernel: fcn_forward.9
$region0: #{fcn_forward.9}
  #allocation0 [shape = 'u32[]', space=smem, size = 0x4, offset = 0x4, fixed_abs, tag = 'smem constant byte address 0x4 - core index']
  #allocation1 [shape = 'u32[72,128]{1,0:T(1,128)}', space=vmem, size = 0x9000, scoped, tag = 'internal scratch']
  %s0 = inlined_call_operand.vmem [shape: bf16[64,288], index: 0, kind: input, shape index: {}]
  %s1 = inlined_call_operand.vmem [shape: bf16[288,64], index: 1, kind: input, shape index: {}]
  %s2 = inlined_call_operand.vmem [shape: f32[16,1], index: 2, kind: input, shape index: {}]
  %s3 = inlined_call_operand.vmem [shape: f32[16,1], index: 3, kind: input, shape index: {}]
  %s4 = inlined_call_operand.vmem [shape: bf16[64,64], index: 4, kind: output, shape index: {}]
  %s5 = sld [smem:[#allocation0]]
  $region26: #{fcn_forward.9} parent=0
    _
  %s7 = ssub.s32 1, %s5
  %s8 = scalar_select 0, %s7, %s5
  // Predicated region
  $region2: #{fcn_forward.9} parent=0 // pred_check
    _
  $region3: #{fcn_forward.9} parent=0 // pred_check_branch
    %10 = sbr.rel (0) target = $region5
  $region4: #{fcn_forward.9} parent=0 // pred_region
    _
  $region5: #{fcn_forward.9} parent=0 // pred_fallthru
    _
  // Predicated region
  $region6: #{fcn_forward.9} parent=0 // pred_check
    _
  $region7: #{fcn_forward.9} parent=0 // pred_check_branch
    %12 = sbr.rel (0) target = $region9
  $region8: #{fcn_forward.9} parent=0 // pred_region
    _
  $region9: #{fcn_forward.9} parent=0 // pred_fallthru
    _
  // Predicated region
  $region10: #{fcn_forward.9} parent=0 // pred_check
    _
  $region11: #{fcn_forward.9} parent=0 // pred_check_branch
    %14 = sbr.rel (0) target = $region13
  $region12: #{fcn_forward.9} parent=0 // pred_region
    _
  $region13: #{fcn_forward.9} parent=0 // pred_fallthru
    _
  // Predicated region
  $region14: #{fcn_forward.9} parent=0 // pred_check
    _
  $region15: #{fcn_forward.9} parent=0 // pred_check_branch
    %16 = sbr.rel (0) target = $region17
  $region16: #{fcn_forward.9} parent=0 // pred_region
    _
  $region17: #{fcn_forward.9} parent=0 // pred_fallthru
    _
  %v18 = vld [vmem:[%s0] sm:$0xff]
  %v19 = vld [vmem:[%s0 + $0x8] sm:$0xf]
  %v20 = vld [vmem:[%s0 + $0xc] sm:$0xff]
  %v21 = vld [vmem:[%s0 + $0x14] sm:$0xf]
  %v22 = vld [vmem:[%s0 + $0x18] sm:$0xff]
  %v23 = vld [vmem:[%s0 + $0x20] sm:$0xf]
  %v24 = vld [vmem:[%s0 + $0x24] sm:$0xff]
  %v25 = vld [vmem:[%s0 + $0x2c] sm:$0xf]
  %v26 = vld [vmem:[%s0 + $0x30] sm:$0xff]
  %v27 = vld [vmem:[%s0 + $0x38] sm:$0xf]
  %v28 = vld [vmem:[%s0 + $0x3c] sm:$0xff]
  %v29 = vld [vmem:[%s0 + $0x44] sm:$0xf]
  %v30 = vld [vmem:[%s0 + $0x48] sm:$0xff]
  %v31 = vld [vmem:[%s0 + $0x50] sm:$0xf]
  %v32 = vld [vmem:[%s0 + $0x54] sm:$0xff]
  %v33 = vld [vmem:[%s0 + $0x5c] sm:$0xf]
  %v34 = vld [vmem:[%s1] sm:$0xf]
  %v35 = vld [vmem:[%s1 + $0x4] sm:$0xf]
  %v36 = vld [vmem:[%s1 + $0x8] sm:$0xf]
  %v37 = vld [vmem:[%s1 + $0xc] sm:$0xf]
  %v38 = vld [vmem:[%s1 + $0x10] sm:$0xf]
  %v39 = vld [vmem:[%s1 + $0x14] sm:$0xf]
  %v40 = vld [vmem:[%s1 + $0x18] sm:$0xf]
  %v41 = vld [vmem:[%s1 + $0x1c] sm:$0xf]
  %v42 = vld [vmem:[%s1 + $0x20] sm:$0xf]
  %v43 = vld [vmem:[%s1 + $0x24] sm:$0xf]
  %v44 = vld [vmem:[%s1 + $0x28] sm:$0xf]
  %v45 = vld [vmem:[%s1 + $0x2c] sm:$0xf]
  %v46 = vld [vmem:[%s1 + $0x30] sm:$0xf]
  %v47 = vld [vmem:[%s1 + $0x34] sm:$0xf]
  %v48 = vld [vmem:[%s1 + $0x38] sm:$0xf]
  %v49 = vld [vmem:[%s1 + $0x3c] sm:$0xf]
  %v50 = vld [vmem:[%s1 + $0x40] sm:$0xf]
  %v51 = vld [vmem:[%s1 + $0x44] sm:$0xf]
  %v52 = vld [vmem:[%s1 + $0x48] sm:$0xf]
  %v53 = vld [vmem:[%s1 + $0x4c] sm:$0xf]
  %v54 = vld [vmem:[%s1 + $0x50] sm:$0xf]
  %v55 = vld [vmem:[%s1 + $0x54] sm:$0xf]
  %v56 = vld [vmem:[%s1 + $0x58] sm:$0xf]
  %v57 = vld [vmem:[%s1 + $0x5c] sm:$0xf]
  %v58 = vld [vmem:[%s1 + $0x60] sm:$0xf]
  %v59 = vld [vmem:[%s1 + $0x64] sm:$0xf]
  %v60 = vld [vmem:[%s1 + $0x68] sm:$0xf]
  %v61 = vld [vmem:[%s1 + $0x6c] sm:$0xf]
  %v62 = vld [vmem:[%s1 + $0x70] sm:$0xf]
  %v63 = vld [vmem:[%s1 + $0x74] sm:$0xf]
  %v64 = vld [vmem:[%s1 + $0x78] sm:$0xf]
  %v65 = vld [vmem:[%s1 + $0x7c] sm:$0xf]
  %v66 = vld [vmem:[%s1 + $0x80] sm:$0xf]
  %v67 = vld [vmem:[%s1 + $0x84] sm:$0xf]
  %v68 = vld [vmem:[%s1 + $0x88] sm:$0xf]
  %v69 = vld [vmem:[%s1 + $0x8c] sm:$0xf]
  %v86 = vunpack.c.l.b16 %v18
  %v87 = vunpack.c.h.b16 %v18
  %v88 = vunpack.c.l.b16 %v19
  %v89 = vunpack.c.l.b16 %v20
  %v90 = vunpack.c.h.b16 %v20
  %v91 = vunpack.c.l.b16 %v21
  %v92 = vunpack.c.l.b16 %v22
  %v93 = vunpack.c.h.b16 %v22
  %v94 = vunpack.c.l.b16 %v23
  %v95 = vunpack.c.l.b16 %v24
  %v96 = vunpack.c.h.b16 %v24
  %v97 = vunpack.c.l.b16 %v25
  %v98 = vunpack.c.l.b16 %v26
  %v99 = vunpack.c.h.b16 %v26
  %v100 = vunpack.c.l.b16 %v27
  %v101 = vunpack.c.l.b16 %v28
  %v102 = vunpack.c.h.b16 %v28
  %v103 = vunpack.c.l.b16 %v29
  %v104 = vunpack.c.l.b16 %v30
  %v105 = vunpack.c.h.b16 %v30
  %v106 = vunpack.c.l.b16 %v31
  %v107 = vunpack.c.l.b16 %v32
  %v108 = vunpack.c.h.b16 %v32
  %v109 = vunpack.c.l.b16 %v33
  %v110 = vpack.c.b16 %v89, %v86
  %v111 = vpack.c.b16 %v90, %v87
  %v112 = vpack.c.b16 %v91, %v88
  %v113 = vpack.c.b16 %v95, %v92
  %v114 = vpack.c.b16 %v96, %v93
  %v115 = vpack.c.b16 %v97, %v94
  %v116 = vpack.c.b16 %v101, %v98
  %v117 = vpack.c.b16 %v102, %v99
  %v118 = vpack.c.b16 %v103, %v100
  %v119 = vpack.c.b16 %v107, %v104
  %v120 = vpack.c.b16 %v108, %v105
  %v121 = vpack.c.b16 %v109, %v106
  %v166 = vunpack.c.l.b16 %v34
  %v167 = vunpack.c.l.b16 %v35
  %v168 = vunpack.c.l.b16 %v36
  %v169 = vunpack.c.l.b16 %v37
  %v170 = vunpack.c.l.b16 %v38
  %v171 = vunpack.c.l.b16 %v39
  %v172 = vunpack.c.l.b16 %v40
  %v173 = vunpack.c.l.b16 %v41
  %v174 = vunpack.c.l.b16 %v42
  %v175 = vunpack.c.l.b16 %v43
  %v176 = vunpack.c.l.b16 %v44
  %v177 = vunpack.c.l.b16 %v45
  %v178 = vunpack.c.l.b16 %v46
  %v179 = vunpack.c.l.b16 %v47
  %v180 = vunpack.c.l.b16 %v48
  %v181 = vunpack.c.l.b16 %v49
  %v182 = vunpack.c.l.b16 %v50
  %v183 = vunpack.c.l.b16 %v51
  %v184 = vunpack.c.l.b16 %v52
  %v185 = vunpack.c.l.b16 %v53
  %v186 = vunpack.c.l.b16 %v54
  %v187 = vunpack.c.l.b16 %v55
  %v188 = vunpack.c.l.b16 %v56
  %v189 = vunpack.c.l.b16 %v57
  %v190 = vunpack.c.l.b16 %v58
  %v191 = vunpack.c.l.b16 %v59
  %v192 = vunpack.c.l.b16 %v60
  %v193 = vunpack.c.l.b16 %v61
  %v194 = vunpack.c.l.b16 %v62
  %v195 = vunpack.c.l.b16 %v63
  %v196 = vunpack.c.l.b16 %v64
  %v197 = vunpack.c.l.b16 %v65
  %v198 = vunpack.c.l.b16 %v66
  %v199 = vunpack.c.l.b16 %v67
  %v200 = vunpack.c.l.b16 %v68
  %v201 = vunpack.c.l.b16 %v69
  %v202 = vpack.c.b16 %v167, %v166
  %v203 = vpack.c.b16 %v169, %v168
  %v204 = vpack.c.b16 %v171, %v170
  %v205 = vpack.c.b16 %v173, %v172
  %v206 = vpack.c.b16 %v175, %v174
  %v207 = vpack.c.b16 %v177, %v176
  %v208 = vpack.c.b16 %v179, %v178
  %v209 = vpack.c.b16 %v181, %v180
  %v210 = vpack.c.b16 %v183, %v182
  %v211 = vpack.c.b16 %v185, %v184
  %v212 = vpack.c.b16 %v187, %v186
  %v213 = vpack.c.b16 %v189, %v188
  %v214 = vpack.c.b16 %v191, %v190
  %v215 = vpack.c.b16 %v193, %v192
  %v216 = vpack.c.b16 %v195, %v194
  %v217 = vpack.c.b16 %v197, %v196
  %v218 = vpack.c.b16 %v199, %v198
  %v219 = vpack.c.b16 %v201, %v200
  %vm238 = vcmask 261120
  %v240 = vsel %vm238, %v112, 0
  %v243 = vsel %vm238, %v115, 0
  %v246 = vsel %vm238, %v118, 0
  %v249 = vsel %vm238, %v121, 0
  %251 = vmatpush.bf16.msra.mxu0 %v209
  %252 = vmatpush.bf16.msra.mxu0 %v208
  %253 = vmatpush.bf16.msra.mxu0 %v207
  %254 = vmatpush.bf16.msra.mxu0 %v206
  %255 = vmatpush.bf16.msra.mxu0 %v205
  %256 = vmatpush.bf16.msra.mxu0 %v204
  %257 = vmatpush.bf16.msra.mxu0 %v203
  %258 = vmatpush.bf16.msra.mxu0 %v202
  %259 = vmatmul.bf16.gmra.mxu0 %v110
  %v260 = vpop.f32.mrf.mxu0
  %v261 = vadd.f32 0.0, %v260
  %v262 = vpop.f32.mrf.mxu0
  %v263 = vadd.f32 0.0, %v262
  %264 = vmatmul.bf16.gmra.mxu0 %v113
  %v265 = vpop.f32.mrf.mxu0
  %v266 = vadd.f32 0.0, %v265
  %v267 = vpop.f32.mrf.mxu0
  %v268 = vadd.f32 0.0, %v267
  %269 = vmatmul.bf16.gmra.mxu0 %v116
  %v270 = vpop.f32.mrf.mxu0
  %v271 = vadd.f32 0.0, %v270
  %v272 = vpop.f32.mrf.mxu0
  %v273 = vadd.f32 0.0, %v272
  %274 = vmatmul.bf16.gmra.mxu0 %v119
  %v275 = vpop.f32.mrf.mxu0
  %v276 = vadd.f32 0.0, %v275
  %v277 = vpop.f32.mrf.mxu0
  %v278 = vadd.f32 0.0, %v277
  %279 = vdwg.mxu0
  %280 = vmatpush.bf16.msra.mxu0 %v217
  %281 = vmatpush.bf16.msra.mxu0 %v216
  %282 = vmatpush.bf16.msra.mxu0 %v215
  %283 = vmatpush.bf16.msra.mxu0 %v214
  %284 = vmatpush.bf16.msra.mxu0 %v213
  %285 = vmatpush.bf16.msra.mxu0 %v212
  %286 = vmatpush.bf16.msra.mxu0 %v211
  %287 = vmatpush.bf16.msra.mxu0 %v210
  %288 = vmatmul.bf16.gmra.mxu0 %v111
  %v289 = vpop.f32.mrf.mxu0
  %v290 = vadd.f32 %v261, %v289
  %v291 = vpop.f32.mrf.mxu0
  %v292 = vadd.f32 %v263, %v291
  %293 = vmatmul.bf16.gmra.mxu0 %v114
  %v294 = vpop.f32.mrf.mxu0
  %v295 = vadd.f32 %v266, %v294
  %v296 = vpop.f32.mrf.mxu0
  %v297 = vadd.f32 %v268, %v296
  %298 = vmatmul.bf16.gmra.mxu0 %v117
  %v299 = vpop.f32.mrf.mxu0
  %v300 = vadd.f32 %v271, %v299
  %v301 = vpop.f32.mrf.mxu0
  %v302 = vadd.f32 %v273, %v301
  %303 = vmatmul.bf16.gmra.mxu0 %v120
  %v304 = vpop.f32.mrf.mxu0
  %v305 = vadd.f32 %v276, %v304
  %v306 = vpop.f32.mrf.mxu0
  %v307 = vadd.f32 %v278, %v306
  %308 = vdwg.mxu0
  %309 = vmatpush.bf16.msra.mxu0 0
  %310 = vmatpush.bf16.msra.mxu0 0
  %311 = vmatpush.bf16.msra.mxu0 0
  %312 = vmatpush.bf16.msra.mxu0 0
  %313 = vmatpush.bf16.msra.mxu0 0
  %314 = vmatpush.bf16.msra.mxu0 0
  %315 = vmatpush.bf16.msra.mxu0 %v219
  %316 = vmatpush.bf16.msra.mxu0 %v218
  %317 = vmatmul.bf16.gmra.mxu0 %v240
  %v318 = vpop.f32.mrf.mxu0
  %v319 = vadd.f32 %v290, %v318
  %v320 = vpop.f32.mrf.mxu0
  %v321 = vadd.f32 %v292, %v320
  %322 = vmatmul.bf16.gmra.mxu0 %v243
  %v323 = vpop.f32.mrf.mxu0
  %v324 = vadd.f32 %v295, %v323
  %v325 = vpop.f32.mrf.mxu0
  %v326 = vadd.f32 %v297, %v325
  %327 = vmatmul.bf16.gmra.mxu0 %v246
  %v328 = vpop.f32.mrf.mxu0
  %v329 = vadd.f32 %v300, %v328
  %v330 = vpop.f32.mrf.mxu0
  %v331 = vadd.f32 %v302, %v330
  %332 = vmatmul.bf16.gmra.mxu0 %v249
  %v333 = vpop.f32.mrf.mxu0
  %v334 = vadd.f32 %v305, %v333
  %v335 = vpop.f32.mrf.mxu0
  %v336 = vadd.f32 %v307, %v335
  %337 = vdwg.mxu0
  %vm338 = vcmask 523264
  %v339 = vsel %vm338, %v319, 0.0
  %340 = vadd.xlane.f32.xlu0 %v339
  %v341 = vpop.xlane.xlu0 %340
  %v342 = vsel %vm338, %v321, 0.0
  %343 = vadd.xlane.f32.xlu0 %v342
  %v344 = vpop.xlane.xlu0 %343
  %v345 = vsel %vm338, %v324, 0.0
  %346 = vadd.xlane.f32.xlu0 %v345
  %v347 = vpop.xlane.xlu0 %346
  %v348 = vsel %vm338, %v326, 0.0
  %349 = vadd.xlane.f32.xlu0 %v348
  %v350 = vpop.xlane.xlu0 %349
  %v351 = vsel %vm338, %v329, 0.0
  %352 = vadd.xlane.f32.xlu0 %v351
  %v353 = vpop.xlane.xlu0 %352
  %v354 = vsel %vm338, %v331, 0.0
  %355 = vadd.xlane.f32.xlu0 %v354
  %v356 = vpop.xlane.xlu0 %355
  %v357 = vsel %vm338, %v334, 0.0
  %358 = vadd.xlane.f32.xlu0 %v357
  %v359 = vpop.xlane.xlu0 %358
  %v360 = vsel %vm338, %v336, 0.0
  %361 = vadd.xlane.f32.xlu0 %v360
  %v362 = vpop.xlane.xlu0 %361
  %v363 = vadd.f32 %v341, %v347
  %v364 = vadd.f32 %v344, %v350
  %v365 = vadd.f32 %v363, %v353
  %v366 = vadd.f32 %v364, %v356
  %v367 = vadd.f32 %v365, %v359
  %v368 = vadd.f32 %v366, %v362
  %v369 = vmul.f32 %v367, 0.00390625
  %v370 = vmul.f32 %v368, 0.00390625
  %372 = vset.pattern.permute.xlu0 0
  %373 = vperm.xlu0 %372, %v369
  %v374 = vpop.permute.xlu0 %373
  %377 = vset.pattern.permute.xlu0 0
  %378 = vperm.xlu0 %377, %v370
  %v379 = vpop.permute.xlu0 %378
  %v381 = vsub.f32 %v319, %v374
  %v382 = vsub.f32 %v321, %v379
  %v383 = vsub.f32 %v324, %v374
  %v384 = vsub.f32 %v326, %v379
  %v385 = vsub.f32 %v329, %v374
  %v386 = vsub.f32 %v331, %v379
  %v387 = vsub.f32 %v334, %v374
  %v388 = vsub.f32 %v336, %v379
  %v389 = vmul.f32 %v381, %v381
  %v390 = vmul.f32 %v382, %v382
  %v391 = vmul.f32 %v383, %v383
  %v392 = vmul.f32 %v384, %v384
  %v393 = vmul.f32 %v385, %v385
  %v394 = vmul.f32 %v386, %v386
  %v395 = vmul.f32 %v387, %v387
  %v396 = vmul.f32 %v388, %v388
  %v397 = vsel %vm338, %v389, 0.0
  %398 = vadd.xlane.f32.xlu0 %v397
  %v399 = vpop.xlane.xlu0 %398
  %v400 = vsel %vm338, %v390, 0.0
  %401 = vadd.xlane.f32.xlu0 %v400
  %v402 = vpop.xlane.xlu0 %401
  %v403 = vsel %vm338, %v391, 0.0
  %404 = vadd.xlane.f32.xlu0 %v403
  %v405 = vpop.xlane.xlu0 %404
  %v406 = vsel %vm338, %v392, 0.0
  %407 = vadd.xlane.f32.xlu0 %v406
  %v408 = vpop.xlane.xlu0 %407
  %v409 = vsel %vm338, %v393, 0.0
  %410 = vadd.xlane.f32.xlu0 %v409
  %v411 = vpop.xlane.xlu0 %410
  %v412 = vsel %vm338, %v394, 0.0
  %413 = vadd.xlane.f32.xlu0 %v412
  %v414 = vpop.xlane.xlu0 %413
  %v415 = vsel %vm338, %v395, 0.0
  %416 = vadd.xlane.f32.xlu0 %v415
  %v417 = vpop.xlane.xlu0 %416
  %v418 = vsel %vm338, %v396, 0.0
  %419 = vadd.xlane.f32.xlu0 %v418
  %v420 = vpop.xlane.xlu0 %419
  %v421 = vadd.f32 %v399, %v405
  %v422 = vadd.f32 %v402, %v408
  %v423 = vadd.f32 %v421, %v411
  %v424 = vadd.f32 %v422, %v414
  %v425 = vadd.f32 %v423, %v417
  %v426 = vadd.f32 %v424, %v420
  %v427 = vmul.f32 %v425, 0.00390625
  %v428 = vmul.f32 %v426, 0.00390625
  %v429 = vld [vmem:[%s2] sm:$0xff]
  %v430 = vld [vmem:[%s2 + $0x8] sm:$0xff]
  %v431 = vadd.f32 %v427, 1e-05
  %v432 = vadd.f32 %v428, 1e-05
  %v433 = vrsqrt.pop %v431
  %v434 = vmul.f32 %v433, %v431
  %v435 = vmul.f32 %v434, %v433
  %v436 = vmul.f32 0.5, %v435
  %v437 = vsub.f32 1.5, %v436
  %v438 = vmul.f32 %v433, %v437
  %vm439 = vweird.f32 %v431
  %vm440 = vweird.f32 %v433
  %vm441 = vmor %vm439, %vm440
  %v442 = vsel %vm441, %v433, %v438
  %v443 = vrsqrt.pop %v432
  %v444 = vmul.f32 %v443, %v432
  %v445 = vmul.f32 %v444, %v443
  %v446 = vmul.f32 0.5, %v445
  %v447 = vsub.f32 1.5, %v446
  %v448 = vmul.f32 %v443, %v447
  %vm449 = vweird.f32 %v432
  %vm450 = vweird.f32 %v443
  %vm451 = vmor %vm449, %vm450
  %v452 = vsel %vm451, %v443, %v448
  %v453 = vmul.f32 %v429, %v442
  %v454 = vmul.f32 %v430, %v452
  %v455 = vld [vmem:[%s3] sm:$0xff]
  %v456 = vld [vmem:[%s3 + $0x8] sm:$0xff]
  %v457 = vmul.f32 %v369, %v453
  %v458 = vmul.f32 %v370, %v454
  %v459 = vsub.f32 %v455, %v457
  %v460 = vsub.f32 %v456, %v458
  %462 = vset.pattern.permute.xlu0 0
  %463 = vperm.xlu0 %462, %v453
  %v464 = vpop.permute.xlu0 %463
  %467 = vset.pattern.permute.xlu0 0
  %468 = vperm.xlu0 %467, %v454
  %v469 = vpop.permute.xlu0 %468
  %v471 = vmul.f32 %v319, %v464
  %v472 = vmul.f32 %v321, %v469
  %v473 = vmul.f32 %v324, %v464
  %v474 = vmul.f32 %v326, %v469
  %v475 = vmul.f32 %v329, %v464
  %v476 = vmul.f32 %v331, %v469
  %v477 = vmul.f32 %v334, %v464
  %v478 = vmul.f32 %v336, %v469
  %480 = vset.pattern.permute.xlu0 0
  %481 = vperm.xlu0 %480, %v459
  %v482 = vpop.permute.xlu0 %481
  %485 = vset.pattern.permute.xlu0 0
  %486 = vperm.xlu0 %485, %v460
  %v487 = vpop.permute.xlu0 %486
  %v489 = vadd.f32 %v471, %v482
  %v490 = vadd.f32 %v472, %v487
  %v491 = vadd.f32 %v473, %v482
  %v492 = vadd.f32 %v474, %v487
  %v493 = vadd.f32 %v475, %v482
  %v494 = vadd.f32 %v476, %v487
  %v495 = vadd.f32 %v477, %v482
  %v496 = vadd.f32 %v478, %v487
  %v497 = vmax.f32 %v489, 0.0
  %v498 = vmax.f32 %v490, 0.0
  %v499 = vmax.f32 %v491, 0.0
  %v500 = vmax.f32 %v492, 0.0
  %v501 = vmax.f32 %v493, 0.0
  %v502 = vmax.f32 %v494, 0.0
  %v503 = vmax.f32 %v495, 0.0
  %v504 = vmax.f32 %v496, 0.0
  %v505 = vpack.c.bf16 %v497, %v497
  %v506 = vpack.c.bf16 %v498, %v498
  %v507 = vpack.c.bf16 %v499, %v499
  %v508 = vpack.c.bf16 %v500, %v500
  %v509 = vpack.c.bf16 %v501, %v501
  %v510 = vpack.c.bf16 %v502, %v502
  %v511 = vpack.c.bf16 %v503, %v503
  %v512 = vpack.c.bf16 %v504, %v504
  %vm513 = vcmask 519168
  %514 = vst.msk [vmem:[%s4] sm:$0xf] %vm513, %v505
  %515 = vst.msk [vmem:[%s4 + $0x4] sm:$0xf] %vm513, %v506
  %516 = vst.msk [vmem:[%s4 + $0x8] sm:$0xf] %vm513, %v507
  %517 = vst.msk [vmem:[%s4 + $0xc] sm:$0xf] %vm513, %v508
  %518 = vst.msk [vmem:[%s4 + $0x10] sm:$0xf] %vm513, %v509
  %519 = vst.msk [vmem:[%s4 + $0x14] sm:$0xf] %vm513, %v510
  %520 = vst.msk [vmem:[%s4 + $0x18] sm:$0xf] %vm513, %v511
  %521 = vst.msk [vmem:[%s4 + $0x1c] sm:$0xf] %vm513, %v512
  // Predicated region
  $region18: #{fcn_forward.9} parent=0 // pred_check
    _
  $region19: #{fcn_forward.9} parent=0 // pred_check_branch
    %523 = sbr.rel (0) target = $region21
  $region20: #{fcn_forward.9} parent=0 // pred_region
    _
  $region21: #{fcn_forward.9} parent=0 // pred_fallthru
    _
  // Predicated region
  $region22: #{fcn_forward.9} parent=0 // pred_check
    _
  $region23: #{fcn_forward.9} parent=0 // pred_check_branch
    %525 = sbr.rel (0) target = $region25
  $region24: #{fcn_forward.9} parent=0 // pred_region
    _
  $region25: #{fcn_forward.9} parent=0 // pred_fallthru
    _

// kernel: fcn_forward.10
$region0: #{fcn_forward.10}
  #allocation0 [shape = 'u32[]', space=smem, size = 0x4, offset = 0x4, fixed_abs, tag = 'smem constant byte address 0x4 - core index']
  #allocation1 [shape = 'u32[72,128]{1,0:T(1,128)}', space=vmem, size = 0x9000, scoped, tag = 'internal scratch']
  %s0 = inlined_call_operand.vmem [shape: bf16[32,144], index: 0, kind: input, shape index: {}]
  %s1 = inlined_call_operand.vmem [shape: bf16[144,256], index: 1, kind: input, shape index: {}]
  %s2 = inlined_call_operand.vmem [shape: f32[8,1], index: 2, kind: input, shape index: {}]
  %s3 = inlined_call_operand.vmem [shape: f32[8,1], index: 3, kind: input, shape index: {}]
  %s4 = inlined_call_operand.vmem [shape: bf16[32,256], index: 4, kind: output, shape index: {}]
  %s5 = sld [smem:[#allocation0]]
  $region26: #{fcn_forward.10} parent=0
    _
  %s7 = ssub.s32 1, %s5
  %s8 = scalar_select 0, %s7, %s5
  // Predicated region
  $region2: #{fcn_forward.10} parent=0 // pred_check
    _
  $region3: #{fcn_forward.10} parent=0 // pred_check_branch
    %10 = sbr.rel (0) target = $region5
  $region4: #{fcn_forward.10} parent=0 // pred_region
    _
  $region5: #{fcn_forward.10} parent=0 // pred_fallthru
    _
  // Predicated region
  $region6: #{fcn_forward.10} parent=0 // pred_check
    _
  $region7: #{fcn_forward.10} parent=0 // pred_check_branch
    %12 = sbr.rel (0) target = $region9
  $region8: #{fcn_forward.10} parent=0 // pred_region
    _
  $region9: #{fcn_forward.10} parent=0 // pred_fallthru
    _
  // Predicated region
  $region10: #{fcn_forward.10} parent=0 // pred_check
    _
  $region11: #{fcn_forward.10} parent=0 // pred_check_branch
    %14 = sbr.rel (0) target = $region13
  $region12: #{fcn_forward.10} parent=0 // pred_region
    _
  $region13: #{fcn_forward.10} parent=0 // pred_fallthru
    _
  // Predicated region
  $region14: #{fcn_forward.10} parent=0 // pred_check
    _
  $region15: #{fcn_forward.10} parent=0 // pred_check_branch
    %16 = sbr.rel (0) target = $region17
  $region16: #{fcn_forward.10} parent=0 // pred_region
    _
  $region17: #{fcn_forward.10} parent=0 // pred_fallthru
    _
  %v18 = vld [vmem:[%s0] sm:$0xff]
  %v19 = vld [vmem:[%s0 + $0x8] sm:$0xff]
  %v20 = vld [vmem:[%s0 + $0x10] sm:$0xff]
  %v21 = vld [vmem:[%s0 + $0x18] sm:$0xff]
  %v22 = vld [vmem:[%s1] sm:$0xff]
  %v23 = vld [vmem:[%s1 + $0x8] sm:$0xff]
  %v24 = vld [vmem:[%s1 + $0x10] sm:$0xff]
  %v25 = vld [vmem:[%s1 + $0x18] sm:$0xff]
  %v26 = vld [vmem:[%s1 + $0x20] sm:$0xff]
  %v27 = vld [vmem:[%s1 + $0x28] sm:$0xff]
  %v28 = vld [vmem:[%s1 + $0x30] sm:$0xff]
  %v29 = vld [vmem:[%s1 + $0x38] sm:$0xff]
  %v30 = vld [vmem:[%s1 + $0x40] sm:$0xff]
  %v31 = vld [vmem:[%s1 + $0x48] sm:$0xff]
  %v32 = vld [vmem:[%s1 + $0x50] sm:$0xff]
  %v33 = vld [vmem:[%s1 + $0x58] sm:$0xff]
  %v34 = vld [vmem:[%s1 + $0x60] sm:$0xff]
  %v35 = vld [vmem:[%s1 + $0x68] sm:$0xff]
  %v36 = vld [vmem:[%s1 + $0x70] sm:$0xff]
  %v37 = vld [vmem:[%s1 + $0x78] sm:$0xff]
  %v38 = vld [vmem:[%s1 + $0x80] sm:$0xff]
  %v39 = vld [vmem:[%s1 + $0x88] sm:$0xff]
  %v44 = vunpack.c.l.b16 %v18
  %v45 = vunpack.c.h.b16 %v18
  %v46 = vunpack.c.l.b16 %v19
  %v47 = vunpack.c.h.b16 %v19
  %v48 = vunpack.c.l.b16 %v20
  %v49 = vunpack.c.h.b16 %v20
  %v50 = vunpack.c.l.b16 %v21
  %v51 = vunpack.c.h.b16 %v21
  %v52 = vpack.c.b16 %v46, %v44
  %v53 = vpack.c.b16 %v47, %v45
  %v54 = vpack.c.b16 %v50, %v48
  %v55 = vpack.c.b16 %v51, %v49
  %v76 = vunpack.c.l.b16 %v22
  %v77 = vunpack.c.h.b16 %v22
  %v78 = vunpack.c.l.b16 %v23
  %v79 = vunpack.c.h.b16 %v23
  %v80 = vunpack.c.l.b16 %v24
  %v81 = vunpack.c.h.b16 %v24
  %v82 = vunpack.c.l.b16 %v25
  %v83 = vunpack.c.h.b16 %v25
  %v84 = vunpack.c.l.b16 %v26
  %v85 = vunpack.c.h.b16 %v26
  %v86 = vunpack.c.l.b16 %v27
  %v87 = vunpack.c.h.b16 %v27
  %v88 = vunpack.c.l.b16 %v28
  %v89 = vunpack.c.h.b16 %v28
  %v90 = vunpack.c.l.b16 %v29
  %v91 = vunpack.c.h.b16 %v29
  %v92 = vunpack.c.l.b16 %v30
  %v93 = vunpack.c.h.b16 %v30
  %v94 = vunpack.c.l.b16 %v31
  %v95 = vunpack.c.h.b16 %v31
  %v96 = vunpack.c.l.b16 %v32
  %v97 = vunpack.c.h.b16 %v32
  %v98 = vunpack.c.l.b16 %v33
  %v99 = vunpack.c.h.b16 %v33
  %v100 = vunpack.c.l.b16 %v34
  %v101 = vunpack.c.h.b16 %v34
  %v102 = vunpack.c.l.b16 %v35
  %v103 = vunpack.c.h.b16 %v35
  %v104 = vunpack.c.l.b16 %v36
  %v105 = vunpack.c.h.b16 %v36
  %v106 = vunpack.c.l.b16 %v37
  %v107 = vunpack.c.h.b16 %v37
  %v108 = vunpack.c.l.b16 %v38
  %v109 = vunpack.c.h.b16 %v38
  %v110 = vunpack.c.l.b16 %v39
  %v111 = vunpack.c.h.b16 %v39
  %v112 = vpack.c.b16 %v78, %v76
  %v113 = vpack.c.b16 %v79, %v77
  %v114 = vpack.c.b16 %v82, %v80
  %v115 = vpack.c.b16 %v83, %v81
  %v116 = vpack.c.b16 %v86, %v84
  %v117 = vpack.c.b16 %v87, %v85
  %v118 = vpack.c.b16 %v90, %v88
  %v119 = vpack.c.b16 %v91, %v89
  %v120 = vpack.c.b16 %v94, %v92
  %v121 = vpack.c.b16 %v95, %v93
  %v122 = vpack.c.b16 %v98, %v96
  %v123 = vpack.c.b16 %v99, %v97
  %v124 = vpack.c.b16 %v102, %v100
  %v125 = vpack.c.b16 %v103, %v101
  %v126 = vpack.c.b16 %v106, %v104
  %v127 = vpack.c.b16 %v107, %v105
  %v128 = vpack.c.b16 %v110, %v108
  %v129 = vpack.c.b16 %v111, %v109
  %vm148 = vcmask 130048
  %v150 = vsel %vm148, %v53, 0
  %v153 = vsel %vm148, %v55, 0
  %155 = vmatpush.bf16.msra.mxu0 %v126
  %156 = vmatpush.bf16.msra.mxu0 %v124
  %157 = vmatpush.bf16.msra.mxu0 %v122
  %158 = vmatpush.bf16.msra.mxu0 %v120
  %159 = vmatpush.bf16.msra.mxu0 %v118
  %160 = vmatpush.bf16.msra.mxu0 %v116
  %161 = vmatpush.bf16.msra.mxu0 %v114
  %162 = vmatpush.bf16.msra.mxu0 %v112
  %163 = vmatmul.bf16.gmra.mxu0 %v52
  %v164 = vpop.f32.mrf.mxu0
  %v165 = vadd.f32 0.0, %v164
  %v166 = vpop.f32.mrf.mxu0
  %v167 = vadd.f32 0.0, %v166
  %168 = vmatmul.bf16.gmra.mxu0 %v54
  %v169 = vpop.f32.mrf.mxu0
  %v170 = vadd.f32 0.0, %v169
  %v171 = vpop.f32.mrf.mxu0
  %v172 = vadd.f32 0.0, %v171
  %173 = vdwg.mxu0
  %174 = vmatpush.bf16.msra.mxu0 0
  %175 = vmatpush.bf16.msra.mxu0 0
  %176 = vmatpush.bf16.msra.mxu0 0
  %177 = vmatpush.bf16.msra.mxu0 0
  %178 = vmatpush.bf16.msra.mxu0 0
  %179 = vmatpush.bf16.msra.mxu0 0
  %180 = vmatpush.bf16.msra.mxu0 0
  %181 = vmatpush.bf16.msra.mxu0 %v128
  %182 = vmatmul.bf16.gmra.mxu0 %v150
  %v183 = vpop.f32.mrf.mxu0
  %v184 = vadd.f32 %v165, %v183
  %v185 = vpop.f32.mrf.mxu0
  %v186 = vadd.f32 %v167, %v185
  %187 = vmatmul.bf16.gmra.mxu0 %v153
  %v188 = vpop.f32.mrf.mxu0
  %v189 = vadd.f32 %v170, %v188
  %v190 = vpop.f32.mrf.mxu0
  %v191 = vadd.f32 %v172, %v190
  %192 = vdwg.mxu0
  %193 = vmatpush.bf16.msra.mxu0 %v127
  %194 = vmatpush.bf16.msra.mxu0 %v125
  %195 = vmatpush.bf16.msra.mxu0 %v123
  %196 = vmatpush.bf16.msra.mxu0 %v121
  %197 = vmatpush.bf16.msra.mxu0 %v119
  %198 = vmatpush.bf16.msra.mxu0 %v117
  %199 = vmatpush.bf16.msra.mxu0 %v115
  %200 = vmatpush.bf16.msra.mxu0 %v113
  %201 = vmatmul.bf16.gmra.mxu0 %v52
  %v202 = vpop.f32.mrf.mxu0
  %v203 = vadd.f32 0.0, %v202
  %v204 = vpop.f32.mrf.mxu0
  %v205 = vadd.f32 0.0, %v204
  %206 = vmatmul.bf16.gmra.mxu0 %v54
  %v207 = vpop.f32.mrf.mxu0
  %v208 = vadd.f32 0.0, %v207
  %v209 = vpop.f32.mrf.mxu0
  %v210 = vadd.f32 0.0, %v209
  %211 = vdwg.mxu0
  %212 = vmatpush.bf16.msra.mxu0 0
  %213 = vmatpush.bf16.msra.mxu0 0
  %214 = vmatpush.bf16.msra.mxu0 0
  %215 = vmatpush.bf16.msra.mxu0 0
  %216 = vmatpush.bf16.msra.mxu0 0
  %217 = vmatpush.bf16.msra.mxu0 0
  %218 = vmatpush.bf16.msra.mxu0 0
  %219 = vmatpush.bf16.msra.mxu0 %v129
  %220 = vmatmul.bf16.gmra.mxu0 %v150
  %v221 = vpop.f32.mrf.mxu0
  %v222 = vadd.f32 %v203, %v221
  %v223 = vpop.f32.mrf.mxu0
  %v224 = vadd.f32 %v205, %v223
  %225 = vmatmul.bf16.gmra.mxu0 %v153
  %v226 = vpop.f32.mrf.mxu0
  %v227 = vadd.f32 %v208, %v226
  %v228 = vpop.f32.mrf.mxu0
  %v229 = vadd.f32 %v210, %v228
  %230 = vdwg.mxu0
  %v231 = vadd.f32 %v184, %v222
  %232 = vadd.xlane.f32.xlu0 %v231
  %v233 = vpop.xlane.xlu0 %232
  %v234 = vadd.f32 %v186, %v224
  %235 = vadd.xlane.f32.xlu0 %v234
  %v236 = vpop.xlane.xlu0 %235
  %v237 = vadd.f32 %v189, %v227
  %238 = vadd.xlane.f32.xlu0 %v237
  %v239 = vpop.xlane.xlu0 %238
  %v240 = vadd.f32 %v191, %v229
  %241 = vadd.xlane.f32.xlu0 %v240
  %v242 = vpop.xlane.xlu0 %241
  %v243 = vadd.f32 %v233, %v236
  %v244 = vadd.f32 %v243, %v239
  %v245 = vadd.f32 %v244, %v242
  %v246 = vmul.f32 %v245, 0.0009765625
  %248 = vset.pattern.permute.xlu0 0
  %249 = vperm.xlu0 %248, %v246
  %v250 = vpop.permute.xlu0 %249
  %v252 = vsub.f32 %v184, %v250
  %v253 = vsub.f32 %v222, %v250
  %v254 = vsub.f32 %v186, %v250
  %v255 = vsub.f32 %v224, %v250
  %v256 = vsub.f32 %v189, %v250
  %v257 = vsub.f32 %v227, %v250
  %v258 = vsub.f32 %v191, %v250
  %v259 = vsub.f32 %v229, %v250
  %v260 = vmul.f32 %v252, %v252
  %v261 = vmul.f32 %v253, %v253
  %v262 = vmul.f32 %v254, %v254
  %v263 = vmul.f32 %v255, %v255
  %v264 = vmul.f32 %v256, %v256
  %v265 = vmul.f32 %v257, %v257
  %v266 = vmul.f32 %v258, %v258
  %v267 = vmul.f32 %v259, %v259
  %v268 = vadd.f32 %v260, %v261
  %269 = vadd.xlane.f32.xlu0 %v268
  %v270 = vpop.xlane.xlu0 %269
  %v271 = vadd.f32 %v262, %v263
  %272 = vadd.xlane.f32.xlu0 %v271
  %v273 = vpop.xlane.xlu0 %272
  %v274 = vadd.f32 %v264, %v265
  %275 = vadd.xlane.f32.xlu0 %v274
  %v276 = vpop.xlane.xlu0 %275
  %v277 = vadd.f32 %v266, %v267
  %278 = vadd.xlane.f32.xlu0 %v277
  %v279 = vpop.xlane.xlu0 %278
  %v280 = vadd.f32 %v270, %v273
  %v281 = vadd.f32 %v280, %v276
  %v282 = vadd.f32 %v281, %v279
  %v283 = vmul.f32 %v282, 0.0009765625
  %v284 = vld [vmem:[%s2] sm:$0xff]
  %v285 = vadd.f32 %v283, 1e-05
  %v286 = vrsqrt.pop %v285
  %v287 = vmul.f32 %v286, %v285
  %v288 = vmul.f32 %v287, %v286
  %v289 = vmul.f32 0.5, %v288
  %v290 = vsub.f32 1.5, %v289
  %v291 = vmul.f32 %v286, %v290
  %vm292 = vweird.f32 %v285
  %vm293 = vweird.f32 %v286
  %vm294 = vmor %vm292, %vm293
  %v295 = vsel %vm294, %v286, %v291
  %v296 = vmul.f32 %v284, %v295
  %v297 = vld [vmem:[%s3] sm:$0xff]
  %v298 = vmul.f32 %v246, %v296
  %v299 = vsub.f32 %v297, %v298
  %301 = vset.pattern.permute.xlu0 0
  %302 = vperm.xlu0 %301, %v296
  %v303 = vpop.permute.xlu0 %302
  %v305 = vmul.f32 %v184, %v303
  %v306 = vmul.f32 %v222, %v303
  %v307 = vmul.f32 %v186, %v303
  %v308 = vmul.f32 %v224, %v303
  %v309 = vmul.f32 %v189, %v303
  %v310 = vmul.f32 %v227, %v303
  %v311 = vmul.f32 %v191, %v303
  %v312 = vmul.f32 %v229, %v303
  %314 = vset.pattern.permute.xlu0 0
  %315 = vperm.xlu0 %314, %v299
  %v316 = vpop.permute.xlu0 %315
  %v318 = vadd.f32 %v305, %v316
  %v319 = vadd.f32 %v306, %v316
  %v320 = vadd.f32 %v307, %v316
  %v321 = vadd.f32 %v308, %v316
  %v322 = vadd.f32 %v309, %v316
  %v323 = vadd.f32 %v310, %v316
  %v324 = vadd.f32 %v311, %v316
  %v325 = vadd.f32 %v312, %v316
  %v326 = vmax.f32 %v318, 0.0
  %v327 = vmax.f32 %v319, 0.0
  %v328 = vmax.f32 %v320, 0.0
  %v329 = vmax.f32 %v321, 0.0
  %v330 = vmax.f32 %v322, 0.0
  %v331 = vmax.f32 %v323, 0.0
  %v332 = vmax.f32 %v324, 0.0
  %v333 = vmax.f32 %v325, 0.0
  %v334 = vpack.c.bf16 %v327, %v326
  %v335 = vpack.c.bf16 %v329, %v328
  %v336 = vpack.c.bf16 %v331, %v330
  %v337 = vpack.c.bf16 %v333, %v332
  %338 = vst [vmem:[%s4] sm:$0xff] %v334
  %339 = vst [vmem:[%s4 + $0x8] sm:$0xff] %v335
  %340 = vst [vmem:[%s4 + $0x10] sm:$0xff] %v336
  %341 = vst [vmem:[%s4 + $0x18] sm:$0xff] %v337
  // Predicated region
  $region18: #{fcn_forward.10} parent=0 // pred_check
    _
  $region19: #{fcn_forward.10} parent=0 // pred_check_branch
    %343 = sbr.rel (0) target = $region21
  $region20: #{fcn_forward.10} parent=0 // pred_region
    _
  $region21: #{fcn_forward.10} parent=0 // pred_fallthru
    _
  // Predicated region
  $region22: #{fcn_forward.10} parent=0 // pred_check
    _
  $region23: #{fcn_forward.10} parent=0 // pred_check_branch
    %345 = sbr.rel (0) target = $region25
  $region24: #{fcn_forward.10} parent=0 // pred_region
    _
  $region25: #{fcn_forward.10} parent=0 // pred_fallthru
    _

// kernel: fcn_forward.11
$region0: #{fcn_forward.11}
  #allocation0 [shape = 'u32[]', space=smem, size = 0x4, offset = 0x4, fixed_abs, tag = 'smem constant byte address 0x4 - core index']
  #allocation1 [shape = 'u32[72,128]{1,0:T(1,128)}', space=vmem, size = 0x9000, scoped, tag = 'internal scratch']
  %s0 = inlined_call_operand.vmem [shape: bf16[32,72], index: 0, kind: input, shape index: {}]
  %s1 = inlined_call_operand.vmem [shape: bf16[72,1024], index: 1, kind: input, shape index: {}]
  %s2 = inlined_call_operand.vmem [shape: f32[8,1], index: 2, kind: input, shape index: {}]
  %s3 = inlined_call_operand.vmem [shape: f32[8,1], index: 3, kind: input, shape index: {}]
  %s4 = inlined_call_operand.vmem [shape: f32[32,1024], index: 4, kind: output, shape index: {}]
  %s5 = sld [smem:[#allocation0]]
  $region26: #{fcn_forward.11} parent=0
    _
  %s7 = ssub.s32 1, %s5
  %s8 = scalar_select 0, %s7, %s5
  // Predicated region
  $region2: #{fcn_forward.11} parent=0 // pred_check
    _
  $region3: #{fcn_forward.11} parent=0 // pred_check_branch
    %10 = sbr.rel (0) target = $region5
  $region4: #{fcn_forward.11} parent=0 // pred_region
    _
  $region5: #{fcn_forward.11} parent=0 // pred_fallthru
    _
  // Predicated region
  $region6: #{fcn_forward.11} parent=0 // pred_check
    _
  $region7: #{fcn_forward.11} parent=0 // pred_check_branch
    %12 = sbr.rel (0) target = $region9
  $region8: #{fcn_forward.11} parent=0 // pred_region
    _
  $region9: #{fcn_forward.11} parent=0 // pred_fallthru
    _
  // Predicated region
  $region10: #{fcn_forward.11} parent=0 // pred_check
    _
  $region11: #{fcn_forward.11} parent=0 // pred_check_branch
    %14 = sbr.rel (0) target = $region13
  $region12: #{fcn_forward.11} parent=0 // pred_region
    _
  $region13: #{fcn_forward.11} parent=0 // pred_fallthru
    _
  // Predicated region
  $region14: #{fcn_forward.11} parent=0 // pred_check
    _
  $region15: #{fcn_forward.11} parent=0 // pred_check_branch
    %16 = sbr.rel (0) target = $region17
  $region16: #{fcn_forward.11} parent=0 // pred_region
    _
  $region17: #{fcn_forward.11} parent=0 // pred_fallthru
    _
  %v18 = vld [vmem:[%s0] sm:$0xf]
  %v19 = vld [vmem:[%s0 + $0x4] sm:$0xf]
  %v20 = vld [vmem:[%s0 + $0x8] sm:$0xf]
  %v21 = vld [vmem:[%s0 + $0xc] sm:$0xf]
  %v22 = vld [vmem:[%s1] sm:$0xff]
  %v23 = vld [vmem:[%s1 + $0x8] sm:$0xff]
  %v24 = vld [vmem:[%s1 + $0x10] sm:$0xff]
  %v25 = vld [vmem:[%s1 + $0x18] sm:$0xff]
  %v26 = vld [vmem:[%s1 + $0x20] sm:$0xff]
  %v27 = vld [vmem:[%s1 + $0x28] sm:$0xff]
  %v28 = vld [vmem:[%s1 + $0x30] sm:$0xff]
  %v29 = vld [vmem:[%s1 + $0x38] sm:$0xff]
  %v30 = vld [vmem:[%s1 + $0x40] sm:$0xff]
  %v31 = vld [vmem:[%s1 + $0x48] sm:$0xff]
  %v32 = vld [vmem:[%s1 + $0x50] sm:$0xff]
  %v33 = vld [vmem:[%s1 + $0x58] sm:$0xff]
  %v34 = vld [vmem:[%s1 + $0x60] sm:$0xff]
  %v35 = vld [vmem:[%s1 + $0x68] sm:$0xff]
  %v36 = vld [vmem:[%s1 + $0x70] sm:$0xff]
  %v37 = vld [vmem:[%s1 + $0x78] sm:$0xff]
  %v38 = vld [vmem:[%s1 + $0x80] sm:$0xff]
  %v39 = vld [vmem:[%s1 + $0x88] sm:$0xff]
  %v40 = vld [vmem:[%s1 + $0x90] sm:$0xff]
  %v41 = vld [vmem:[%s1 + $0x98] sm:$0xff]
  %v42 = vld [vmem:[%s1 + $0xa0] sm:$0xff]
  %v43 = vld [vmem:[%s1 + $0xa8] sm:$0xff]
  %v44 = vld [vmem:[%s1 + $0xb0] sm:$0xff]
  %v45 = vld [vmem:[%s1 + $0xb8] sm:$0xff]
  %v46 = vld [vmem:[%s1 + $0xc0] sm:$0xff]
  %v47 = vld [vmem:[%s1 + $0xc8] sm:$0xff]
  %v48 = vld [vmem:[%s1 + $0xd0] sm:$0xff]
  %v49 = vld [vmem:[%s1 + $0xd8] sm:$0xff]
  %v50 = vld [vmem:[%s1 + $0xe0] sm:$0xff]
  %v51 = vld [vmem:[%s1 + $0xe8] sm:$0xff]
  %v52 = vld [vmem:[%s1 + $0xf0] sm:$0xff]
  %v53 = vld [vmem:[%s1 + $0xf8] sm:$0xff]
  %v54 = vld [vmem:[%s1 + $0x100] sm:$0xff]
  %v55 = vld [vmem:[%s1 + $0x108] sm:$0xff]
  %v56 = vld [vmem:[%s1 + $0x110] sm:$0xff]
  %v57 = vld [vmem:[%s1 + $0x118] sm:$0xff]
  %v62 = vunpack.c.l.b16 %v18
  %v63 = vunpack.c.l.b16 %v19
  %v64 = vunpack.c.l.b16 %v20
  %v65 = vunpack.c.l.b16 %v21
  %v66 = vpack.c.b16 %v63, %v62
  %v67 = vpack.c.b16 %v65, %v64
  %v104 = vunpack.c.l.b16 %v22
  %v105 = vunpack.c.h.b16 %v22
  %v106 = vunpack.c.l.b16 %v23
  %v107 = vunpack.c.h.b16 %v23
  %v108 = vunpack.c.l.b16 %v24
  %v109 = vunpack.c.h.b16 %v24
  %v110 = vunpack.c.l.b16 %v25
  %v111 = vunpack.c.h.b16 %v25
  %v112 = vunpack.c.l.b16 %v26
  %v113 = vunpack.c.h.b16 %v26
  %v114 = vunpack.c.l.b16 %v27
  %v115 = vunpack.c.h.b16 %v27
  %v116 = vunpack.c.l.b16 %v28
  %v117 = vunpack.c.h.b16 %v28
  %v118 = vunpack.c.l.b16 %v29
  %v119 = vunpack.c.h.b16 %v29
  %v120 = vunpack.c.l.b16 %v30
  %v121 = vunpack.c.h.b16 %v30
  %v122 = vunpack.c.l.b16 %v31
  %v123 = vunpack.c.h.b16 %v31
  %v124 = vunpack.c.l.b16 %v32
  %v125 = vunpack.c.h.b16 %v32
  %v126 = vunpack.c.l.b16 %v33
  %v127 = vunpack.c.h.b16 %v33
  %v128 = vunpack.c.l.b16 %v34
  %v129 = vunpack.c.h.b16 %v34
  %v130 = vunpack.c.l.b16 %v35
  %v131 = vunpack.c.h.b16 %v35
  %v132 = vunpack.c.l.b16 %v36
  %v133 = vunpack.c.h.b16 %v36
  %v134 = vunpack.c.l.b16 %v37
  %v135 = vunpack.c.h.b16 %v37
  %v136 = vunpack.c.l.b16 %v38
  %v137 = vunpack.c.h.b16 %v38
  %v138 = vunpack.c.l.b16 %v39
  %v139 = vunpack.c.h.b16 %v39
  %v140 = vunpack.c.l.b16 %v40
  %v141 = vunpack.c.h.b16 %v40
  %v142 = vunpack.c.l.b16 %v41
  %v143 = vunpack.c.h.b16 %v41
  %v144 = vunpack.c.l.b16 %v42
  %v145 = vunpack.c.h.b16 %v42
  %v146 = vunpack.c.l.b16 %v43
  %v147 = vunpack.c.h.b16 %v43
  %v148 = vunpack.c.l.b16 %v44
  %v149 = vunpack.c.h.b16 %v44
  %v150 = vunpack.c.l.b16 %v45
  %v151 = vunpack.c.h.b16 %v45
  %v152 = vunpack.c.l.b16 %v46
  %v153 = vunpack.c.h.b16 %v46
  %v154 = vunpack.c.l.b16 %v47
  %v155 = vunpack.c.h.b16 %v47
  %v156 = vunpack.c.l.b16 %v48
  %v157 = vunpack.c.h.b16 %v48
  %v158 = vunpack.c.l.b16 %v49
  %v159 = vunpack.c.h.b16 %v49
  %v160 = vunpack.c.l.b16 %v50
  %v161 = vunpack.c.h.b16 %v50
  %v162 = vunpack.c.l.b16 %v51
  %v163 = vunpack.c.h.b16 %v51
  %v164 = vunpack.c.l.b16 %v52
  %v165 = vunpack.c.h.b16 %v52
  %v166 = vunpack.c.l.b16 %v53
  %v167 = vunpack.c.h.b16 %v53
  %v168 = vunpack.c.l.b16 %v54
  %v169 = vunpack.c.h.b16 %v54
  %v170 = vunpack.c.l.b16 %v55
  %v171 = vunpack.c.h.b16 %v55
  %v172 = vunpack.c.l.b16 %v56
  %v173 = vunpack.c.h.b16 %v56
  %v174 = vunpack.c.l.b16 %v57
  %v175 = vunpack.c.h.b16 %v57
  %v176 = vpack.c.b16 %v112, %v104
  %v177 = vpack.c.b16 %v113, %v105
  %v178 = vpack.c.b16 %v114, %v106
  %v179 = vpack.c.b16 %v115, %v107
  %v180 = vpack.c.b16 %v116, %v108
  %v181 = vpack.c.b16 %v117, %v109
  %v182 = vpack.c.b16 %v118, %v110
  %v183 = vpack.c.b16 %v119, %v111
  %v184 = vpack.c.b16 %v128, %v120
  %v185 = vpack.c.b16 %v129, %v121
  %v186 = vpack.c.b16 %v130, %v122
  %v187 = vpack.c.b16 %v131, %v123
  %v188 = vpack.c.b16 %v132, %v124
  %v189 = vpack.c.b16 %v133, %v125
  %v190 = vpack.c.b16 %v134, %v126
  %v191 = vpack.c.b16 %v135, %v127
  %v192 = vpack.c.b16 %v144, %v136
  %v193 = vpack.c.b16 %v145, %v137
  %v194 = vpack.c.b16 %v146, %v138
  %v195 = vpack.c.b16 %v147, %v139
  %v196 = vpack.c.b16 %v148, %v140
  %v197 = vpack.c.b16 %v149, %v141
  %v198 = vpack.c.b16 %v150, %v142
  %v199 = vpack.c.b16 %v151, %v143
  %v200 = vpack.c.b16 %v160, %v152
  %v201 = vpack.c.b16 %v161, %v153
  %v202 = vpack.c.b16 %v162, %v154
  %v203 = vpack.c.b16 %v163, %v155
  %v204 = vpack.c.b16 %v164, %v156
  %v205 = vpack.c.b16 %v165, %v157
  %v206 = vpack.c.b16 %v166, %v158
  %v207 = vpack.c.b16 %v167, %v159
  %v208 = vpack.c.b16 %v168, %v168
  %v209 = vpack.c.b16 %v169, %v169
  %v210 = vpack.c.b16 %v170, %v170
  %v211 = vpack.c.b16 %v171, %v171
  %v212 = vpack.c.b16 %v172, %v172
  %v213 = vpack.c.b16 %v173, %v173
  %v214 = vpack.c.b16 %v174, %v174
  %v215 = vpack.c.b16 %v175, %v175
  %vm248 = vcmask 588800
  %v250 = vsel %vm248, %v66, 0
  %v253 = vsel %vm248, %v67, 0
  %vm255 = vcmask 1043456
  %v257 = vsel %vm255, %v208, 0
  %v260 = vsel %vm255, %v209, 0
  %v263 = vsel %vm255, %v210, 0
  %v266 = vsel %vm255, %v211, 0
  %v269 = vsel %vm255, %v212, 0
  %v272 = vsel %vm255, %v213, 0
  %v275 = vsel %vm255, %v214, 0
  %v278 = vsel %vm255, %v215, 0
  %280 = vmatpush.bf16.msra.mxu0 0
  %281 = vmatpush.bf16.msra.mxu0 0
  %282 = vmatpush.bf16.msra.mxu0 0
  %283 = vmatpush.bf16.msra.mxu0 %v257
  %284 = vmatpush.bf16.msra.mxu0 %v200
  %285 = vmatpush.bf16.msra.mxu0 %v192
  %286 = vmatpush.bf16.msra.mxu0 %v184
  %287 = vmatpush.bf16.msra.mxu0 %v176
  %288 = vmatmul.bf16.gmra.mxu0 %v250
  %v289 = vpop.f32.mrf.mxu0
  %v290 = vadd.f32 0.0, %v289
  %v291 = vpop.f32.mrf.mxu0
  %v292 = vadd.f32 0.0, %v291
  %293 = vmatmul.bf16.gmra.mxu0 %v253
  %v294 = vpop.f32.mrf.mxu0
  %v295 = vadd.f32 0.0, %v294
  %v296 = vpop.f32.mrf.mxu0
  %v297 = vadd.f32 0.0, %v296
  %298 = vdwg.mxu0
  %299 = vmatpush.bf16.msra.mxu0 0
  %300 = vmatpush.bf16.msra.mxu0 0
  %301 = vmatpush.bf16.msra.mxu0 0
  %302 = vmatpush.bf16.msra.mxu0 %v260
  %303 = vmatpush.bf16.msra.mxu0 %v201
  %304 = vmatpush.bf16.msra.mxu0 %v193
  %305 = vmatpush.bf16.msra.mxu0 %v185
  %306 = vmatpush.bf16.msra.mxu0 %v177
  %307 = vmatmul.bf16.gmra.mxu0 %v250
  %v308 = vpop.f32.mrf.mxu0
  %v309 = vadd.f32 0.0, %v308
  %v310 = vpop.f32.mrf.mxu0
  %v311 = vadd.f32 0.0, %v310
  %312 = vmatmul.bf16.gmra.mxu0 %v253
  %v313 = vpop.f32.mrf.mxu0
  %v314 = vadd.f32 0.0, %v313
  %v315 = vpop.f32.mrf.mxu0
  %v316 = vadd.f32 0.0, %v315
  %317 = vdwg.mxu0
  %318 = vmatpush.bf16.msra.mxu0 0
  %319 = vmatpush.bf16.msra.mxu0 0
  %320 = vmatpush.bf16.msra.mxu0 0
  %321 = vmatpush.bf16.msra.mxu0 %v263
  %322 = vmatpush.bf16.msra.mxu0 %v202
  %323 = vmatpush.bf16.msra.mxu0 %v194
  %324 = vmatpush.bf16.msra.mxu0 %v186
  %325 = vmatpush.bf16.msra.mxu0 %v178
  %326 = vmatmul.bf16.gmra.mxu0 %v250
  %v327 = vpop.f32.mrf.mxu0
  %v328 = vadd.f32 0.0, %v327
  %v329 = vpop.f32.mrf.mxu0
  %v330 = vadd.f32 0.0, %v329
  %331 = vmatmul.bf16.gmra.mxu0 %v253
  %v332 = vpop.f32.mrf.mxu0
  %v333 = vadd.f32 0.0, %v332
  %v334 = vpop.f32.mrf.mxu0
  %v335 = vadd.f32 0.0, %v334
  %336 = vdwg.mxu0
  %337 = vmatpush.bf16.msra.mxu0 0
  %338 = vmatpush.bf16.msra.mxu0 0
  %339 = vmatpush.bf16.msra.mxu0 0
  %340 = vmatpush.bf16.msra.mxu0 %v266
  %341 = vmatpush.bf16.msra.mxu0 %v203
  %342 = vmatpush.bf16.msra.mxu0 %v195
  %343 = vmatpush.bf16.msra.mxu0 %v187
  %344 = vmatpush.bf16.msra.mxu0 %v179
  %345 = vmatmul.bf16.gmra.mxu0 %v250
  %v346 = vpop.f32.mrf.mxu0
  %v347 = vadd.f32 0.0, %v346
  %v348 = vpop.f32.mrf.mxu0
  %v349 = vadd.f32 0.0, %v348
  %350 = vmatmul.bf16.gmra.mxu0 %v253
  %v351 = vpop.f32.mrf.mxu0
  %v352 = vadd.f32 0.0, %v351
  %v353 = vpop.f32.mrf.mxu0
  %v354 = vadd.f32 0.0, %v353
  %355 = vdwg.mxu0
  %356 = vmatpush.bf16.msra.mxu0 0
  %357 = vmatpush.bf16.msra.mxu0 0
  %358 = vmatpush.bf16.msra.mxu0 0
  %359 = vmatpush.bf16.msra.mxu0 %v269
  %360 = vmatpush.bf16.msra.mxu0 %v204
  %361 = vmatpush.bf16.msra.mxu0 %v196
  %362 = vmatpush.bf16.msra.mxu0 %v188
  %363 = vmatpush.bf16.msra.mxu0 %v180
  %364 = vmatmul.bf16.gmra.mxu0 %v250
  %v365 = vpop.f32.mrf.mxu0
  %v366 = vadd.f32 0.0, %v365
  %v367 = vpop.f32.mrf.mxu0
  %v368 = vadd.f32 0.0, %v367
  %369 = vmatmul.bf16.gmra.mxu0 %v253
  %v370 = vpop.f32.mrf.mxu0
  %v371 = vadd.f32 0.0, %v370
  %v372 = vpop.f32.mrf.mxu0
  %v373 = vadd.f32 0.0, %v372
  %374 = vdwg.mxu0
  %375 = vmatpush.bf16.msra.mxu0 0
  %376 = vmatpush.bf16.msra.mxu0 0
  %377 = vmatpush.bf16.msra.mxu0 0
  %378 = vmatpush.bf16.msra.mxu0 %v272
  %379 = vmatpush.bf16.msra.mxu0 %v205
  %380 = vmatpush.bf16.msra.mxu0 %v197
  %381 = vmatpush.bf16.msra.mxu0 %v189
  %382 = vmatpush.bf16.msra.mxu0 %v181
  %383 = vmatmul.bf16.gmra.mxu0 %v250
  %v384 = vpop.f32.mrf.mxu0
  %v385 = vadd.f32 0.0, %v384
  %v386 = vpop.f32.mrf.mxu0
  %v387 = vadd.f32 0.0, %v386
  %388 = vmatmul.bf16.gmra.mxu0 %v253
  %v389 = vpop.f32.mrf.mxu0
  %v390 = vadd.f32 0.0, %v389
  %v391 = vpop.f32.mrf.mxu0
  %v392 = vadd.f32 0.0, %v391
  %393 = vdwg.mxu0
  %394 = vmatpush.bf16.msra.mxu0 0
  %395 = vmatpush.bf16.msra.mxu0 0
  %396 = vmatpush.bf16.msra.mxu0 0
  %397 = vmatpush.bf16.msra.mxu0 %v275
  %398 = vmatpush.bf16.msra.mxu0 %v206
  %399 = vmatpush.bf16.msra.mxu0 %v198
  %400 = vmatpush.bf16.msra.mxu0 %v190
  %401 = vmatpush.bf16.msra.mxu0 %v182
  %402 = vmatmul.bf16.gmra.mxu0 %v250
  %v403 = vpop.f32.mrf.mxu0
  %v404 = vadd.f32 0.0, %v403
  %v405 = vpop.f32.mrf.mxu0
  %v406 = vadd.f32 0.0, %v405
  %407 = vmatmul.bf16.gmra.mxu0 %v253
  %v408 = vpop.f32.mrf.mxu0
  %v409 = vadd.f32 0.0, %v408
  %v410 = vpop.f32.mrf.mxu0
  %v411 = vadd.f32 0.0, %v410
  %412 = vdwg.mxu0
  %413 = vmatpush.bf16.msra.mxu0 0
  %414 = vmatpush.bf16.msra.mxu0 0
  %415 = vmatpush.bf16.msra.mxu0 0
  %416 = vmatpush.bf16.msra.mxu0 %v278
  %417 = vmatpush.bf16.msra.mxu0 %v207
  %418 = vmatpush.bf16.msra.mxu0 %v199
  %419 = vmatpush.bf16.msra.mxu0 %v191
  %420 = vmatpush.bf16.msra.mxu0 %v183
  %421 = vmatmul.bf16.gmra.mxu0 %v250
  %v422 = vpop.f32.mrf.mxu0
  %v423 = vadd.f32 0.0, %v422
  %v424 = vpop.f32.mrf.mxu0
  %v425 = vadd.f32 0.0, %v424
  %426 = vmatmul.bf16.gmra.mxu0 %v253
  %v427 = vpop.f32.mrf.mxu0
  %v428 = vadd.f32 0.0, %v427
  %v429 = vpop.f32.mrf.mxu0
  %v430 = vadd.f32 0.0, %v429
  %431 = vdwg.mxu0
  %v432 = vadd.f32 %v290, %v309
  %v433 = vadd.f32 %v432, %v328
  %v434 = vadd.f32 %v433, %v347
  %v435 = vadd.f32 %v434, %v366
  %v436 = vadd.f32 %v435, %v385
  %v437 = vadd.f32 %v436, %v404
  %v438 = vadd.f32 %v437, %v423
  %439 = vadd.xlane.f32.xlu0 %v438
  %v440 = vpop.xlane.xlu0 %439
  %v441 = vadd.f32 %v292, %v311
  %v442 = vadd.f32 %v441, %v330
  %v443 = vadd.f32 %v442, %v349
  %v444 = vadd.f32 %v443, %v368
  %v445 = vadd.f32 %v444, %v387
  %v446 = vadd.f32 %v445, %v406
  %v447 = vadd.f32 %v446, %v425
  %448 = vadd.xlane.f32.xlu0 %v447
  %v449 = vpop.xlane.xlu0 %448
  %v450 = vadd.f32 %v295, %v314
  %v451 = vadd.f32 %v450, %v333
  %v452 = vadd.f32 %v451, %v352
  %v453 = vadd.f32 %v452, %v371
  %v454 = vadd.f32 %v453, %v390
  %v455 = vadd.f32 %v454, %v409
  %v456 = vadd.f32 %v455, %v428
  %457 = vadd.xlane.f32.xlu0 %v456
  %v458 = vpop.xlane.xlu0 %457
  %v459 = vadd.f32 %v297, %v316
  %v460 = vadd.f32 %v459, %v335
  %v461 = vadd.f32 %v460, %v354
  %v462 = vadd.f32 %v461, %v373
  %v463 = vadd.f32 %v462, %v392
  %v464 = vadd.f32 %v463, %v411
  %v465 = vadd.f32 %v464, %v430
  %466 = vadd.xlane.f32.xlu0 %v465
  %v467 = vpop.xlane.xlu0 %466
  %v468 = vadd.f32 %v440, %v449
  %v469 = vadd.f32 %v468, %v458
  %v470 = vadd.f32 %v469, %v467
  %v471 = vmul.f32 %v470, 0.00024414063
  %473 = vset.pattern.permute.xlu0 0
  %474 = vperm.xlu0 %473, %v471
  %v475 = vpop.permute.xlu0 %474
  %v477 = vsub.f32 %v290, %v475
  %v478 = vsub.f32 %v309, %v475
  %v479 = vsub.f32 %v328, %v475
  %v480 = vsub.f32 %v347, %v475
  %v481 = vsub.f32 %v366, %v475
  %v482 = vsub.f32 %v385, %v475
  %v483 = vsub.f32 %v404, %v475
  %v484 = vsub.f32 %v423, %v475
  %v485 = vsub.f32 %v292, %v475
  %v486 = vsub.f32 %v311, %v475
  %v487 = vsub.f32 %v330, %v475
  %v488 = vsub.f32 %v349, %v475
  %v489 = vsub.f32 %v368, %v475
  %v490 = vsub.f32 %v387, %v475
  %v491 = vsub.f32 %v406, %v475
  %v492 = vsub.f32 %v425, %v475
  %v493 = vsub.f32 %v295, %v475
  %v494 = vsub.f32 %v314, %v475
  %v495 = vsub.f32 %v333, %v475
  %v496 = vsub.f32 %v352, %v475
  %v497 = vsub.f32 %v371, %v475
  %v498 = vsub.f32 %v390, %v475
  %v499 = vsub.f32 %v409, %v475
  %v500 = vsub.f32 %v428, %v475
  %v501 = vsub.f32 %v297, %v475
  %v502 = vsub.f32 %v316, %v475
  %v503 = vsub.f32 %v335, %v475
  %v504 = vsub.f32 %v354, %v475
  %v505 = vsub.f32 %v373, %v475
  %v506 = vsub.f32 %v392, %v475
  %v507 = vsub.f32 %v411, %v475
  %v508 = vsub.f32 %v430, %v475
  %v509 = vmul.f32 %v477, %v477
  %v510 = vmul.f32 %v478, %v478
  %v511 = vmul.f32 %v479, %v479
  %v512 = vmul.f32 %v480, %v480
  %v513 = vmul.f32 %v481, %v481
  %v514 = vmul.f32 %v482, %v482
  %v515 = vmul.f32 %v483, %v483
  %v516 = vmul.f32 %v484, %v484
  %v517 = vmul.f32 %v485, %v485
  %v518 = vmul.f32 %v486, %v486
  %v519 = vmul.f32 %v487, %v487
  %v520 = vmul.f32 %v488, %v488
  %v521 = vmul.f32 %v489, %v489
  %v522 = vmul.f32 %v490, %v490
  %v523 = vmul.f32 %v491, %v491
  %v524 = vmul.f32 %v492, %v492
  %v525 = vmul.f32 %v493, %v493
  %v526 = vmul.f32 %v494, %v494
  %v527 = vmul.f32 %v495, %v495
  %v528 = vmul.f32 %v496, %v496
  %v529 = vmul.f32 %v497, %v497
  %v530 = vmul.f32 %v498, %v498
  %v531 = vmul.f32 %v499, %v499
  %v532 = vmul.f32 %v500, %v500
  %v533 = vmul.f32 %v501, %v501
  %v534 = vmul.f32 %v502, %v502
  %v535 = vmul.f32 %v503, %v503
  %v536 = vmul.f32 %v504, %v504
  %v537 = vmul.f32 %v505, %v505
  %v538 = vmul.f32 %v506, %v506
  %v539 = vmul.f32 %v507, %v507
  %v540 = vmul.f32 %v508, %v508
  %v541 = vadd.f32 %v509, %v510
  %v542 = vadd.f32 %v541, %v511
  %v543 = vadd.f32 %v542, %v512
  %v544 = vadd.f32 %v543, %v513
  %v545 = vadd.f32 %v544, %v514
  %v546 = vadd.f32 %v545, %v515
  %v547 = vadd.f32 %v546, %v516
  %548 = vadd.xlane.f32.xlu0 %v547
  %v549 = vpop.xlane.xlu0 %548
  %v550 = vadd.f32 %v517, %v518
  %v551 = vadd.f32 %v550, %v519
  %v552 = vadd.f32 %v551, %v520
  %v553 = vadd.f32 %v552, %v521
  %v554 = vadd.f32 %v553, %v522
  %v555 = vadd.f32 %v554, %v523
  %v556 = vadd.f32 %v555, %v524
  %557 = vadd.xlane.f32.xlu0 %v556
  %v558 = vpop.xlane.xlu0 %557
  %v559 = vadd.f32 %v525, %v526
  %v560 = vadd.f32 %v559, %v527
  %v561 = vadd.f32 %v560, %v528
  %v562 = vadd.f32 %v561, %v529
  %v563 = vadd.f32 %v562, %v530
  %v564 = vadd.f32 %v563, %v531
  %v565 = vadd.f32 %v564, %v532
  %566 = vadd.xlane.f32.xlu0 %v565
  %v567 = vpop.xlane.xlu0 %566
  %v568 = vadd.f32 %v533, %v534
  %v569 = vadd.f32 %v568, %v535
  %v570 = vadd.f32 %v569, %v536
  %v571 = vadd.f32 %v570, %v537
  %v572 = vadd.f32 %v571, %v538
  %v573 = vadd.f32 %v572, %v539
  %v574 = vadd.f32 %v573, %v540
  %575 = vadd.xlane.f32.xlu0 %v574
  %v576 = vpop.xlane.xlu0 %575
  %v577 = vadd.f32 %v549, %v558
  %v578 = vadd.f32 %v577, %v567
  %v579 = vadd.f32 %v578, %v576
  %v580 = vmul.f32 %v579, 0.00024414063
  %v581 = vld [vmem:[%s2] sm:$0xff]
  %v582 = vadd.f32 %v580, 1e-05
  %v583 = vrsqrt.pop %v582
  %v584 = vmul.f32 %v583, %v582
  %v585 = vmul.f32 %v584, %v583
  %v586 = vmul.f32 0.5, %v585
  %v587 = vsub.f32 1.5, %v586
  %v588 = vmul.f32 %v583, %v587
  %vm589 = vweird.f32 %v582
  %vm590 = vweird.f32 %v583
  %vm591 = vmor %vm589, %vm590
  %v592 = vsel %vm591, %v583, %v588
  %v593 = vmul.f32 %v581, %v592
  %v594 = vld [vmem:[%s3] sm:$0xff]
  %v595 = vmul.f32 %v471, %v593
  %v596 = vsub.f32 %v594, %v595
  %598 = vset.pattern.permute.xlu0 0
  %599 = vperm.xlu0 %598, %v593
  %v600 = vpop.permute.xlu0 %599
  %v602 = vmul.f32 %v290, %v600
  %v603 = vmul.f32 %v309, %v600
  %v604 = vmul.f32 %v328, %v600
  %v605 = vmul.f32 %v347, %v600
  %v606 = vmul.f32 %v366, %v600
  %v607 = vmul.f32 %v385, %v600
  %v608 = vmul.f32 %v404, %v600
  %v609 = vmul.f32 %v423, %v600
  %v610 = vmul.f32 %v292, %v600
  %v611 = vmul.f32 %v311, %v600
  %v612 = vmul.f32 %v330, %v600
  %v613 = vmul.f32 %v349, %v600
  %v614 = vmul.f32 %v368, %v600
  %v615 = vmul.f32 %v387, %v600
  %v616 = vmul.f32 %v406, %v600
  %v617 = vmul.f32 %v425, %v600
  %v618 = vmul.f32 %v295, %v600
  %v619 = vmul.f32 %v314, %v600
  %v620 = vmul.f32 %v333, %v600
  %v621 = vmul.f32 %v352, %v600
  %v622 = vmul.f32 %v371, %v600
  %v623 = vmul.f32 %v390, %v600
  %v624 = vmul.f32 %v409, %v600
  %v625 = vmul.f32 %v428, %v600
  %v626 = vmul.f32 %v297, %v600
  %v627 = vmul.f32 %v316, %v600
  %v628 = vmul.f32 %v335, %v600
  %v629 = vmul.f32 %v354, %v600
  %v630 = vmul.f32 %v373, %v600
  %v631 = vmul.f32 %v392, %v600
  %v632 = vmul.f32 %v411, %v600
  %v633 = vmul.f32 %v430, %v600
  %635 = vset.pattern.permute.xlu0 0
  %636 = vperm.xlu0 %635, %v596
  %v637 = vpop.permute.xlu0 %636
  %v639 = vadd.f32 %v602, %v637
  %v640 = vadd.f32 %v603, %v637
  %v641 = vadd.f32 %v604, %v637
  %v642 = vadd.f32 %v605, %v637
  %v643 = vadd.f32 %v606, %v637
  %v644 = vadd.f32 %v607, %v637
  %v645 = vadd.f32 %v608, %v637
  %v646 = vadd.f32 %v609, %v637
  %v647 = vadd.f32 %v610, %v637
  %v648 = vadd.f32 %v611, %v637
  %v649 = vadd.f32 %v612, %v637
  %v650 = vadd.f32 %v613, %v637
  %v651 = vadd.f32 %v614, %v637
  %v652 = vadd.f32 %v615, %v637
  %v653 = vadd.f32 %v616, %v637
  %v654 = vadd.f32 %v617, %v637
  %v655 = vadd.f32 %v618, %v637
  %v656 = vadd.f32 %v619, %v637
  %v657 = vadd.f32 %v620, %v637
  %v658 = vadd.f32 %v621, %v637
  %v659 = vadd.f32 %v622, %v637
  %v660 = vadd.f32 %v623, %v637
  %v661 = vadd.f32 %v624, %v637
  %v662 = vadd.f32 %v625, %v637
  %v663 = vadd.f32 %v626, %v637
  %v664 = vadd.f32 %v627, %v637
  %v665 = vadd.f32 %v628, %v637
  %v666 = vadd.f32 %v629, %v637
  %v667 = vadd.f32 %v630, %v637
  %v668 = vadd.f32 %v631, %v637
  %v669 = vadd.f32 %v632, %v637
  %v670 = vadd.f32 %v633, %v637
  %v671 = vtanh.pop %v639
  %v672 = vtanh.pop %v640
  %v673 = vtanh.pop %v641
  %v674 = vtanh.pop %v642
  %v675 = vtanh.pop %v643
  %v676 = vtanh.pop %v644
  %v677 = vtanh.pop %v645
  %v678 = vtanh.pop %v646
  %v679 = vtanh.pop %v647
  %v680 = vtanh.pop %v648
  %v681 = vtanh.pop %v649
  %v682 = vtanh.pop %v650
  %v683 = vtanh.pop %v651
  %v684 = vtanh.pop %v652
  %v685 = vtanh.pop %v653
  %v686 = vtanh.pop %v654
  %v687 = vtanh.pop %v655
  %v688 = vtanh.pop %v656
  %v689 = vtanh.pop %v657
  %v690 = vtanh.pop %v658
  %v691 = vtanh.pop %v659
  %v692 = vtanh.pop %v660
  %v693 = vtanh.pop %v661
  %v694 = vtanh.pop %v662
  %v695 = vtanh.pop %v663
  %v696 = vtanh.pop %v664
  %v697 = vtanh.pop %v665
  %v698 = vtanh.pop %v666
  %v699 = vtanh.pop %v667
  %v700 = vtanh.pop %v668
  %v701 = vtanh.pop %v669
  %v702 = vtanh.pop %v670
  %703 = vst [vmem:[%s4] sm:$0xff] %v671
  %704 = vst [vmem:[%s4 + $0x8] sm:$0xff] %v672
  %705 = vst [vmem:[%s4 + $0x10] sm:$0xff] %v673
  %706 = vst [vmem:[%s4 + $0x18] sm:$0xff] %v674
  %707 = vst [vmem:[%s4 + $0x20] sm:$0xff] %v675
  %708 = vst [vmem:[%s4 + $0x28] sm:$0xff] %v676
  %709 = vst [vmem:[%s4 + $0x30] sm:$0xff] %v677
  %710 = vst [vmem:[%s4 + $0x38] sm:$0xff] %v678
  %711 = vst [vmem:[%s4 + $0x40] sm:$0xff] %v679
  %712 = vst [vmem:[%s4 + $0x48] sm:$0xff] %v680
  %713 = vst [vmem:[%s4 + $0x50] sm:$0xff] %v681
  %714 = vst [vmem:[%s4 + $0x58] sm:$0xff] %v682
  %715 = vst [vmem:[%s4 + $0x60] sm:$0xff] %v683
  %716 = vst [vmem:[%s4 + $0x68] sm:$0xff] %v684
  %717 = vst [vmem:[%s4 + $0x70] sm:$0xff] %v685
  %718 = vst [vmem:[%s4 + $0x78] sm:$0xff] %v686
  %719 = vst [vmem:[%s4 + $0x80] sm:$0xff] %v687
  %720 = vst [vmem:[%s4 + $0x88] sm:$0xff] %v688
  %721 = vst [vmem:[%s4 + $0x90] sm:$0xff] %v689
  %722 = vst [vmem:[%s4 + $0x98] sm:$0xff] %v690
  %723 = vst [vmem:[%s4 + $0xa0] sm:$0xff] %v691
  %724 = vst [vmem:[%s4 + $0xa8] sm:$0xff] %v692
  %725 = vst [vmem:[%s4 + $0xb0] sm:$0xff] %v693
  %726 = vst [vmem:[%s4 + $0xb8] sm:$0xff] %v694
  %727 = vst [vmem:[%s4 + $0xc0] sm:$0xff] %v695
  %728 = vst [vmem:[%s4 + $0xc8] sm:$0xff] %v696
  %729 = vst [vmem:[%s4 + $0xd0] sm:$0xff] %v697
  %730 = vst [vmem:[%s4 + $0xd8] sm:$0xff] %v698
  %731 = vst [vmem:[%s4 + $0xe0] sm:$0xff] %v699
  %732 = vst [vmem:[%s4 + $0xe8] sm:$0xff] %v700
  %733 = vst [vmem:[%s4 + $0xf0] sm:$0xff] %v701
  %734 = vst [vmem:[%s4 + $0xf8] sm:$0xff] %v702
  // Predicated region
  $region18: #{fcn_forward.11} parent=0 // pred_check
    _
  $region19: #{fcn_forward.11} parent=0 // pred_check_branch
    %736 = sbr.rel (0) target = $region21
  $region20: #{fcn_forward.11} parent=0 // pred_region
    _
  $region21: #{fcn_forward.11} parent=0 // pred_fallthru
    _
  // Predicated region
  $region22: #{fcn_forward.11} parent=0 // pred_check
    _
  $region23: #{fcn_forward.11} parent=0 // pred_check_branch
    %738 = sbr.rel (0) target = $region25
  $region24: #{fcn_forward.11} parent=0 // pred_region
    _
  $region25: #{fcn_forward.11} parent=0 // pred_fallthru
    _

</llo_original>
